<compile_context>
chip_gen: v7x
topology: tpu7x:2x2x1
jax: 0.10.0
libtpu: 0.0.40
codegen_flags: <defaults>
</compile_context>

<pallas_src>
import functools
import math

import jax
import jax.numpy as jnp
from jax.experimental import pallas as pl
from jax.experimental.pallas import tpu as pltpu


# ---------------------------------------------------------------------------
# In-kernel helpers (pure f32 VPU/EUP math)
# ---------------------------------------------------------------------------
def _rmsnorm_f32(x, w):
    # x: (S, H) f32, w: (1, H) f32
    var = jnp.mean(x * x, axis=-1, keepdims=True)
    return x * jax.lax.rsqrt(var + 1e-6) * w


# ---------------------------------------------------------------------------
# Fused decoder-layer kernel (one pallas_call per layer, grid over batch)
# ---------------------------------------------------------------------------
def _decoder_layer_kernel(x_ref, ln1_ref, wqkv_ref, wo_ref,
                          ln2_ref, wg_ref, wu_ref, wd_ref, o_ref,
                          *, n_heads):
    S, H = x_ref.shape[1], x_ref.shape[2]
    Dh = H // n_heads
    scale = 1.0 / math.sqrt(Dh)

    x = x_ref[0].astype(jnp.float32)                     # (S, H) residual stream

    # ---- attention block -------------------------------------------------
    n1 = _rmsnorm_f32(x, ln1_ref[...].astype(jnp.float32))
    # single fused QKV matmul: bf16 MXU inputs, f32 accumulation
    qkv = jnp.dot(n1.astype(jnp.bfloat16), wqkv_ref[...],
                  preferred_element_type=jnp.float32)    # (S, 3H) f32

    row = jax.lax.broadcasted_iota(jnp.int32, (S, S), 0)
    col = jax.lax.broadcasted_iota(jnp.int32, (S, S), 1)
    causal = col <= row

    wo = wo_ref[...]                                     # (H, H) bf16, loaded once
    attn_proj = jnp.zeros((S, H), jnp.float32)
    # static loop over the (small) head count; each head's output is folded
    # directly into the output projection (no concat, no host-side transpose)
    for h in range(n_heads):
        q = qkv[:, h * Dh:(h + 1) * Dh]                  # (S, Dh) f32
        k = qkv[:, H + h * Dh:H + (h + 1) * Dh]
        v = qkv[:, 2 * H + h * Dh:2 * H + (h + 1) * Dh]

        s = jax.lax.dot_general(
            q.astype(jnp.bfloat16), k.astype(jnp.bfloat16),
            (((1,), (1,)), ((), ())),
            preferred_element_type=jnp.float32) * scale  # (S, S) f32
        s = jnp.where(causal, s, -1e30)
        m = jnp.max(s, axis=-1, keepdims=True)
        p = jnp.exp(s - m)                               # f32 (EUP)
        p = p * pl.reciprocal(jnp.sum(p, axis=-1, keepdims=True), approx=True)

        o_h = jnp.dot(p.astype(jnp.bfloat16), v.astype(jnp.bfloat16),
                      preferred_element_type=jnp.float32)          # (S, Dh)
        attn_proj += jnp.dot(o_h.astype(jnp.bfloat16),
                             wo[h * Dh:(h + 1) * Dh, :],
                             preferred_element_type=jnp.float32)   # (S, H)

    x = x + attn_proj                                    # residual, in-kernel

    # ---- MLP block ---------------------------------------------------------
    n2 = _rmsnorm_f32(x, ln2_ref[...].astype(jnp.float32)).astype(jnp.bfloat16)
    g = jnp.dot(n2, wg_ref[...], preferred_element_type=jnp.float32)
    u = jnp.dot(n2, wu_ref[...], preferred_element_type=jnp.float32)
    hidden = (g * jax.nn.sigmoid(g)) * u                 # SiLU gate in f32
    x = x + jnp.dot(hidden.astype(jnp.bfloat16), wd_ref[...],
                    preferred_element_type=jnp.float32)  # residual, in-kernel

    o_ref[0] = x.astype(o_ref.dtype)


def pallas_decoder_layer(x, layer, n_heads):
    B, S, H = x.shape
    inter = layer["wg"].shape[1]
    kernel = functools.partial(_decoder_layer_kernel, n_heads=n_heads)
    return pl.pallas_call(
        kernel,
        out_shape=jax.ShapeDtypeStruct((B, S, H), jnp.float32),
        grid=(B,),
        in_specs=[
            pl.BlockSpec((1, S, H), lambda b: (b, 0, 0)),        # activations
            pl.BlockSpec((1, H), lambda b: (0, 0)),              # ln1
            pl.BlockSpec((H, 3 * H), lambda b: (0, 0)),          # wqkv (bf16)
            pl.BlockSpec((H, H), lambda b: (0, 0)),              # wo   (bf16)
            pl.BlockSpec((1, H), lambda b: (0, 0)),              # ln2
            pl.BlockSpec((H, inter), lambda b: (0, 0)),          # wg   (bf16)
            pl.BlockSpec((H, inter), lambda b: (0, 0)),          # wu   (bf16)
            pl.BlockSpec((inter, H), lambda b: (0, 0)),          # wd   (bf16)
        ],
        out_specs=pl.BlockSpec((1, S, H), lambda b: (b, 0, 0)),
        compiler_params=pltpu.CompilerParams(
            dimension_semantics=("parallel",),
            vmem_limit_bytes=32 * 1024 * 1024,
        ),
    )(x, layer["ln1"], layer["wqkv"], layer["wo"],
      layer["ln2"], layer["wg"], layer["wu"], layer["wd"])


# ---------------------------------------------------------------------------
# Final RMSNorm + token slice, lane-dense (B, S-2, H) store
# ---------------------------------------------------------------------------
def _final_norm_slice_kernel(x_ref, lnf_ref, o_ref):
    S = x_ref.shape[1]
    x = x_ref[0]                                   # (S, H)
    xs = x[1:S - 1, :].astype(jnp.float32)         # drop first/last token
    var = jnp.mean(xs * xs, axis=-1, keepdims=True)
    o_ref[0] = (xs * jax.lax.rsqrt(var + 1e-6)
                * lnf_ref[...].astype(jnp.float32)).astype(o_ref.dtype)


def pallas_final_norm_slice(x, lnf):
    B, S, H = x.shape
    return pl.pallas_call(
        _final_norm_slice_kernel,
        out_shape=jax.ShapeDtypeStruct((B, S - 2, H), jnp.float32),
        grid=(B,),
        in_specs=[
            pl.BlockSpec((1, S, H), lambda b: (b, 0, 0)),
            pl.BlockSpec((1, H), lambda b: (0, 0)),
        ],
        out_specs=pl.BlockSpec((1, S - 2, H), lambda b: (b, 0, 0)),
        compiler_params=pltpu.CompilerParams(
            dimension_semantics=("parallel",),
            vmem_limit_bytes=32 * 1024 * 1024,
        ),
    )(x, lnf)


# ---------------------------------------------------------------------------
# Parameter init (deterministic, synthetic; matmul weights stored in bf16)
# ---------------------------------------------------------------------------
def init_params(key, vocab, hidden, n_layers, inter):
    def nrm(k, shape, scale=0.02, dtype=jnp.bfloat16):
        return (scale * jax.random.normal(k, shape, dtype=jnp.float32)).astype(dtype)

    keys = jax.random.split(key, 1 + n_layers)
    params = {
        "embed": nrm(keys[0], (vocab, hidden), dtype=jnp.float32),
        "lnf": jnp.ones((1, hidden), jnp.float32),
        "layers": [],
    }
    for i in range(n_layers):
        lk = jax.random.split(keys[1 + i], 5)
        params["layers"].append({
            "ln1": jnp.ones((1, hidden), jnp.float32),
            "wqkv": nrm(lk[0], (hidden, 3 * hidden)),
            "wo": nrm(lk[1], (hidden, hidden)),
            "ln2": jnp.ones((1, hidden), jnp.float32),
            "wg": nrm(lk[2], (hidden, inter)),
            "wu": nrm(lk[3], (hidden, inter)),
            "wd": nrm(lk[4], (inter, hidden)),
        })
    return params


# ---------------------------------------------------------------------------
# PlantGFMEmbd.forward
# ---------------------------------------------------------------------------
def plantgfm_embd_forward(params, input_ids, n_heads):
    B, S = input_ids.shape

    # Embedding lookup: tiny gather, kept as JAX glue.
    x = params["embed"][input_ids].astype(jnp.float32)      # (B, S, H)

    # One fused Pallas kernel per decoder layer (residuals folded in).
    for layer in params["layers"]:
        x = pallas_decoder_layer(x, layer, n_heads)

    # Final RMSNorm + embd[:, 1:-1, :] as a lane-dense Pallas store,
    # then the thin NCL transpose in JAX -> (B, H, S-2), matching PyTorch.
    out = pallas_final_norm_slice(x, params["lnf"])          # (B, S-2, H)
    return jnp.swapaxes(out, 1, 2)                           # (B, H, S-2)


# ---------------------------------------------------------------------------
if __name__ == "__main__":
    VOCAB, HIDDEN, N_LAYERS, N_HEADS, INTER = 16, 32, 2, 4, 64
    BATCH, SEQ = 2, 8

    key = jax.random.PRNGKey(0)
    k_params, k_ids = jax.random.split(key)
    params = init_params(k_params, VOCAB, HIDDEN, N_LAYERS, INTER)
    input_ids = jax.random.randint(k_ids, (BATCH, SEQ), 0, VOCAB, dtype=jnp.int32)

    fwd = jax.jit(plantgfm_embd_forward, static_argnums=2)
    embd = fwd(params, input_ids, N_HEADS)
    embd = jax.block_until_ready(embd)

    assert embd.shape == (BATCH, HIDDEN, SEQ - 2), embd.shape
    assert embd.dtype == jnp.float32
    assert bool(jnp.all(jnp.isfinite(embd)))
    print("KERNEL_OK")
</pallas_src>

<mosaic_0001>
module attributes {stable_mosaic.version = 11 : i64} {
  func.func @_final_norm_slice_kernel(%arg0: i32, %arg1: memref<1x8x32xf32, #tpu.memory_space<vmem>>, %arg2: memref<1x32xf32, #tpu.memory_space<vmem>>, %arg3: memref<1x6x32xf32, #tpu.memory_space<vmem>>) attributes {dimension_semantics = [#tpu.dimension_semantics<parallel>], iteration_bounds = array<i64: 2>, scalar_prefetch = 0 : i64, scratch_operands = 0 : i64, tpu.core_type = #tpu.core_type<tc>, window_params = [{transform_indices = @transform_0, window_bounds = array<i64: 1, 8, 32>}, {pipeline_mode = #tpu.pipeline_mode<synchronous>, transform_indices = @transform_1, window_bounds = array<i64: 1, 32>}, {transform_indices = @transform_2, window_bounds = array<i64: 1, 6, 32>}]} {
    %c0 = arith.constant 0 : index
    %c0_0 = arith.constant 0 : index
    %c0_1 = arith.constant 0 : index
    %0 = vector.load %arg1[%c0, %c0_0, %c0_1] : memref<1x8x32xf32, #tpu.memory_space<vmem>>, vector<1x8x32xf32>
    %1 = vector.shape_cast %0 : vector<1x8x32xf32> to vector<8x32xf32>
    %2 = vector.extract_strided_slice %1 {offsets = [1, 0], sizes = [6, 32], strides = [1, 1]} : vector<8x32xf32> to vector<6x32xf32>
    %3 = arith.mulf %2, %2 : vector<6x32xf32>
    %cst = arith.constant dense<0.000000e+00> : vector<6xf32>
    %4 = vector.multi_reduction <add>, %3, %cst [1] : vector<6x32xf32> to vector<6xf32>
    %5 = vector.shape_cast %4 : vector<6xf32> to vector<6x1xf32>
    %cst_2 = arith.constant 3.200000e+01 : f32
    %6 = vector.broadcast %cst_2 : f32 to vector<6x1xf32>
    %7 = arith.divf %5, %6 : vector<6x1xf32>
    %cst_3 = arith.constant 9.99999997E-7 : f32
    %8 = vector.broadcast %cst_3 : f32 to vector<6x1xf32>
    %9 = arith.addf %7, %8 : vector<6x1xf32>
    %10 = math.rsqrt %9 : vector<6x1xf32>
    %11 = vector.broadcast %10 : vector<6x1xf32> to vector<6x32xf32>
    %12 = arith.mulf %2, %11 : vector<6x32xf32>
    %c0_4 = arith.constant 0 : index
    %c0_5 = arith.constant 0 : index
    %13 = vector.load %arg2[%c0_4, %c0_5] : memref<1x32xf32, #tpu.memory_space<vmem>>, vector<1x32xf32>
    %14 = vector.broadcast %13 : vector<1x32xf32> to vector<6x32xf32>
    %15 = arith.mulf %12, %14 : vector<6x32xf32>
    %c0_6 = arith.constant 0 : index
    %c0_7 = arith.constant 0 : index
    %c0_8 = arith.constant 0 : index
    %16 = vector.load %arg3[%c0_6, %c0_7, %c0_8] : memref<1x6x32xf32, #tpu.memory_space<vmem>>, vector<1x6x32xf32>
    %17 = vector.shape_cast %16 : vector<1x6x32xf32> to vector<6x32xf32>
    %18 = vector.shape_cast %15 : vector<6x32xf32> to vector<1x6x32xf32>
    tpu.vector_store %arg3[%c0_6, %c0_7, %c0_8], %18 {strides = array<i32>} : memref<1x6x32xf32, #tpu.memory_space<vmem>>, vector<1x6x32xf32>,
    return
  }
  func.func @transform_0(%arg0: i32) -> (i32, i32, i32) {
    %c0_i32 = arith.constant 0 : i32
    %c0_i32_0 = arith.constant 0 : i32
    %c0_i32_1 = arith.constant 0 : i32
    return %arg0, %c0_i32, %c0_i32_0 : i32, i32, i32
  }
  func.func @transform_1(%arg0: i32) -> (i32, i32) {
    %c0_i32 = arith.constant 0 : i32
    %c0_i32_0 = arith.constant 0 : i32
    %c0_i32_1 = arith.constant 0 : i32
    return %c0_i32, %c0_i32_0 : i32, i32
  }
  func.func @transform_2(%arg0: i32) -> (i32, i32, i32) {
    %c0_i32 = arith.constant 0 : i32
    %c0_i32_0 = arith.constant 0 : i32
    %c0_i32_1 = arith.constant 0 : i32
    return %arg0, %c0_i32, %c0_i32_0 : i32, i32, i32
  }
}

module attributes {stable_mosaic.version = 11 : i64} {
  func.func @_decoder_layer_kernel(%arg0: i32, %arg1: memref<1x8x32xf32, #tpu.memory_space<vmem>>, %arg2: memref<1x32xf32, #tpu.memory_space<vmem>>, %arg3: memref<32x96xbf16, #tpu.memory_space<vmem>>, %arg4: memref<32x32xbf16, #tpu.memory_space<vmem>>, %arg5: memref<1x32xf32, #tpu.memory_space<vmem>>, %arg6: memref<32x64xbf16, #tpu.memory_space<vmem>>, %arg7: memref<32x64xbf16, #tpu.memory_space<vmem>>, %arg8: memref<64x32xbf16, #tpu.memory_space<vmem>>, %arg9: memref<1x8x32xf32, #tpu.memory_space<vmem>>) attributes {dimension_semantics = [#tpu.dimension_semantics<parallel>], iteration_bounds = array<i64: 2>, scalar_prefetch = 0 : i64, scratch_operands = 0 : i64, tpu.core_type = #tpu.core_type<tc>, window_params = [{transform_indices = @transform_0, window_bounds = array<i64: 1, 8, 32>}, {pipeline_mode = #tpu.pipeline_mode<synchronous>, transform_indices = @transform_1, window_bounds = array<i64: 1, 32>}, {pipeline_mode = #tpu.pipeline_mode<synchronous>, transform_indices = @transform_2, window_bounds = array<i64: 32, 96>}, {pipeline_mode = #tpu.pipeline_mode<synchronous>, transform_indices = @transform_3, window_bounds = array<i64: 32, 32>}, {pipeline_mode = #tpu.pipeline_mode<synchronous>, transform_indices = @transform_4, window_bounds = array<i64: 1, 32>}, {pipeline_mode = #tpu.pipeline_mode<synchronous>, transform_indices = @transform_5, window_bounds = array<i64: 32, 64>}, {pipeline_mode = #tpu.pipeline_mode<synchronous>, transform_indices = @transform_6, window_bounds = array<i64: 32, 64>}, {pipeline_mode = #tpu.pipeline_mode<synchronous>, transform_indices = @transform_7, window_bounds = array<i64: 64, 32>}, {transform_indices = @transform_8, window_bounds = array<i64: 1, 8, 32>}]} {
    %c0 = arith.constant 0 : index
    %c0_0 = arith.constant 0 : index
    %c0_1 = arith.constant 0 : index
    %0 = vector.load %arg1[%c0, %c0_0, %c0_1] : memref<1x8x32xf32, #tpu.memory_space<vmem>>, vector<1x8x32xf32>
    %1 = vector.shape_cast %0 : vector<1x8x32xf32> to vector<8x32xf32>
    %c0_2 = arith.constant 0 : index
    %c0_3 = arith.constant 0 : index
    %2 = vector.load %arg2[%c0_2, %c0_3] : memref<1x32xf32, #tpu.memory_space<vmem>>, vector<1x32xf32>
    %3 = arith.mulf %1, %1 : vector<8x32xf32>
    %cst = arith.constant dense<0.000000e+00> : vector<8xf32>
    %4 = vector.multi_reduction <add>, %3, %cst [1] : vector<8x32xf32> to vector<8xf32>
    %5 = vector.shape_cast %4 : vector<8xf32> to vector<8x1xf32>
    %cst_4 = arith.constant 3.200000e+01 : f32
    %6 = vector.broadcast %cst_4 : f32 to vector<8x1xf32>
    %7 = arith.divf %5, %6 : vector<8x1xf32>
    %cst_5 = arith.constant 9.99999997E-7 : f32
    %8 = vector.broadcast %cst_5 : f32 to vector<8x1xf32>
    %9 = arith.addf %7, %8 : vector<8x1xf32>
    %10 = math.rsqrt %9 : vector<8x1xf32>
    %11 = vector.broadcast %10 : vector<8x1xf32> to vector<8x32xf32>
    %12 = arith.mulf %1, %11 : vector<8x32xf32>
    %13 = vector.broadcast %2 : vector<1x32xf32> to vector<8x32xf32>
    %14 = arith.mulf %12, %13 : vector<8x32xf32>
    %15 = arith.truncf %14 : vector<8x32xf32> to vector<8x32xbf16>
    %c0_6 = arith.constant 0 : index
    %c0_7 = arith.constant 0 : index
    %16 = vector.load %arg3[%c0_6, %c0_7] : memref<32x96xbf16, #tpu.memory_space<vmem>>, vector<32x96xbf16>
    %cst_8 = arith.constant dense<0.000000e+00> : vector<8x96xf32>
    %17 = tpu.matmul %15, %16, %cst_8 {dimension_numbers = #tpu.dot_dimension_numbers<[1], [0], [0], [1], [0, 0, 1, 1], [], []>} : vector<8x32xbf16>, vector<32x96xbf16>, vector<8x96xf32> -> vector<8x96xf32>
    %18 = tpu.iota {dimensions = array<i32: 0>} : vector<8x8xi32>
    %19 = tpu.iota {dimensions = array<i32: 1>} : vector<8x8xi32>
    %20 = arith.cmpi sle, %19, %18 : vector<8x8xi32>
    %c0_9 = arith.constant 0 : index
    %c0_10 = arith.constant 0 : index
    %21 = vector.load %arg4[%c0_9, %c0_10] : memref<32x32xbf16, #tpu.memory_space<vmem>>, vector<32x32xbf16>
    %cst_11 = arith.constant 0.000000e+00 : f32
    %22 = vector.broadcast %cst_11 : f32 to vector<8x32xf32>
    %23 = vector.extract_strided_slice %17 {offsets = [0, 0], sizes = [8, 8], strides = [1, 1]} : vector<8x96xf32> to vector<8x8xf32>
    %24 = vector.extract_strided_slice %17 {offsets = [0, 32], sizes = [8, 8], strides = [1, 1]} : vector<8x96xf32> to vector<8x8xf32>
    %25 = vector.extract_strided_slice %17 {offsets = [0, 64], sizes = [8, 8], strides = [1, 1]} : vector<8x96xf32> to vector<8x8xf32>
    %26 = arith.truncf %23 : vector<8x8xf32> to vector<8x8xbf16>
    %27 = arith.truncf %24 : vector<8x8xf32> to vector<8x8xbf16>
    %cst_12 = arith.constant dense<0.000000e+00> : vector<8x8xf32>
    %28 = tpu.matmul %26, %27, %cst_12 {dimension_numbers = #tpu.dot_dimension_numbers<[1], [1], [0], [0], [0, 0, 1, 0], [], []>} : vector<8x8xbf16>, vector<8x8xbf16>, vector<8x8xf32> -> vector<8x8xf32>
    %cst_13 = arith.constant 0.353553385 : f32
    %29 = vector.broadcast %cst_13 : f32 to vector<8x8xf32>
    %30 = arith.mulf %28, %29 : vector<8x8xf32>
    %cst_14 = arith.constant -1.000000e+30 : f32
    %31 = vector.broadcast %cst_14 : f32 to vector<8x8xf32>
    %32 = arith.select %20, %30, %31 : vector<8x8xi1>, vector<8x8xf32>
    %cst_15 = arith.constant dense<0xFF800000> : vector<8xf32>
    %33 = vector.multi_reduction <maximumf>, %32, %cst_15 [1] : vector<8x8xf32> to vector<8xf32>
    %34 = vector.shape_cast %33 : vector<8xf32> to vector<8x1xf32>
    %35 = vector.broadcast %34 : vector<8x1xf32> to vector<8x8xf32>
    %36 = arith.subf %32, %35 : vector<8x8xf32>
    %37 = math.exp %36 : vector<8x8xf32>
    %cst_16 = arith.constant dense<0.000000e+00> : vector<8xf32>
    %38 = vector.multi_reduction <add>, %37, %cst_16 [1] : vector<8x8xf32> to vector<8xf32>
    %39 = vector.shape_cast %38 : vector<8xf32> to vector<8x1xf32>
    %40 = tpu.reciprocal %39 {approx = true} : vector<8x1xf32> -> vector<8x1xf32>
    %41 = vector.broadcast %40 : vector<8x1xf32> to vector<8x8xf32>
    %42 = arith.mulf %37, %41 : vector<8x8xf32>
    %43 = arith.truncf %42 : vector<8x8xf32> to vector<8x8xbf16>
    %44 = arith.truncf %25 : vector<8x8xf32> to vector<8x8xbf16>
    %cst_17 = arith.constant dense<0.000000e+00> : vector<8x8xf32>
    %45 = tpu.matmul %43, %44, %cst_17 {dimension_numbers = #tpu.dot_dimension_numbers<[1], [0], [0], [1], [0, 0, 1, 1], [], []>} : vector<8x8xbf16>, vector<8x8xbf16>, vector<8x8xf32> -> vector<8x8xf32>
    %46 = arith.truncf %45 : vector<8x8xf32> to vector<8x8xbf16>
    %47 = vector.extract_strided_slice %21 {offsets = [0, 0], sizes = [8, 32], strides = [1, 1]} : vector<32x32xbf16> to vector<8x32xbf16>
    %cst_18 = arith.constant dense<0.000000e+00> : vector<8x32xf32>
    %48 = tpu.matmul %46, %47, %cst_18 {dimension_numbers = #tpu.dot_dimension_numbers<[1], [0], [0], [1], [0, 0, 1, 1], [], []>} : vector<8x8xbf16>, vector<8x32xbf16>, vector<8x32xf32> -> vector<8x32xf32>
    %49 = arith.addf %22, %48 : vector<8x32xf32>
    %50 = vector.extract_strided_slice %17 {offsets = [0, 8], sizes = [8, 8], strides = [1, 1]} : vector<8x96xf32> to vector<8x8xf32>
    %51 = vector.extract_strided_slice %17 {offsets = [0, 40], sizes = [8, 8], strides = [1, 1]} : vector<8x96xf32> to vector<8x8xf32>
    %52 = vector.extract_strided_slice %17 {offsets = [0, 72], sizes = [8, 8], strides = [1, 1]} : vector<8x96xf32> to vector<8x8xf32>
    %53 = arith.truncf %50 : vector<8x8xf32> to vector<8x8xbf16>
    %54 = arith.truncf %51 : vector<8x8xf32> to vector<8x8xbf16>
    %cst_19 = arith.constant dense<0.000000e+00> : vector<8x8xf32>
    %55 = tpu.matmul %53, %54, %cst_19 {dimension_numbers = #tpu.dot_dimension_numbers<[1], [1], [0], [0], [0, 0, 1, 0], [], []>} : vector<8x8xbf16>, vector<8x8xbf16>, vector<8x8xf32> -> vector<8x8xf32>
    %cst_20 = arith.constant 0.353553385 : f32
    %56 = vector.broadcast %cst_20 : f32 to vector<8x8xf32>
    %57 = arith.mulf %55, %56 : vector<8x8xf32>
    %cst_21 = arith.constant -1.000000e+30 : f32
    %58 = vector.broadcast %cst_21 : f32 to vector<8x8xf32>
    %59 = arith.select %20, %57, %58 : vector<8x8xi1>, vector<8x8xf32>
    %cst_22 = arith.constant dense<0xFF800000> : vector<8xf32>
    %60 = vector.multi_reduction <maximumf>, %59, %cst_22 [1] : vector<8x8xf32> to vector<8xf32>
    %61 = vector.shape_cast %60 : vector<8xf32> to vector<8x1xf32>
    %62 = vector.broadcast %61 : vector<8x1xf32> to vector<8x8xf32>
    %63 = arith.subf %59, %62 : vector<8x8xf32>
    %64 = math.exp %63 : vector<8x8xf32>
    %cst_23 = arith.constant dense<0.000000e+00> : vector<8xf32>
    %65 = vector.multi_reduction <add>, %64, %cst_23 [1] : vector<8x8xf32> to vector<8xf32>
    %66 = vector.shape_cast %65 : vector<8xf32> to vector<8x1xf32>
    %67 = tpu.reciprocal %66 {approx = true} : vector<8x1xf32> -> vector<8x1xf32>
    %68 = vector.broadcast %67 : vector<8x1xf32> to vector<8x8xf32>
    %69 = arith.mulf %64, %68 : vector<8x8xf32>
    %70 = arith.truncf %69 : vector<8x8xf32> to vector<8x8xbf16>
    %71 = arith.truncf %52 : vector<8x8xf32> to vector<8x8xbf16>
    %cst_24 = arith.constant dense<0.000000e+00> : vector<8x8xf32>
    %72 = tpu.matmul %70, %71, %cst_24 {dimension_numbers = #tpu.dot_dimension_numbers<[1], [0], [0], [1], [0, 0, 1, 1], [], []>} : vector<8x8xbf16>, vector<8x8xbf16>, vector<8x8xf32> -> vector<8x8xf32>
    %73 = arith.truncf %72 : vector<8x8xf32> to vector<8x8xbf16>
    %74 = vector.extract_strided_slice %21 {offsets = [8, 0], sizes = [8, 32], strides = [1, 1]} : vector<32x32xbf16> to vector<8x32xbf16>
    %cst_25 = arith.constant dense<0.000000e+00> : vector<8x32xf32>
    %75 = tpu.matmul %73, %74, %cst_25 {dimension_numbers = #tpu.dot_dimension_numbers<[1], [0], [0], [1], [0, 0, 1, 1], [], []>} : vector<8x8xbf16>, vector<8x32xbf16>, vector<8x32xf32> -> vector<8x32xf32>
    %76 = arith.addf %49, %75 : vector<8x32xf32>
    %77 = vector.extract_strided_slice %17 {offsets = [0, 16], sizes = [8, 8], strides = [1, 1]} : vector<8x96xf32> to vector<8x8xf32>
    %78 = vector.extract_strided_slice %17 {offsets = [0, 48], sizes = [8, 8], strides = [1, 1]} : vector<8x96xf32> to vector<8x8xf32>
    %79 = vector.extract_strided_slice %17 {offsets = [0, 80], sizes = [8, 8], strides = [1, 1]} : vector<8x96xf32> to vector<8x8xf32>
    %80 = arith.truncf %77 : vector<8x8xf32> to vector<8x8xbf16>
    %81 = arith.truncf %78 : vector<8x8xf32> to vector<8x8xbf16>
    %cst_26 = arith.constant dense<0.000000e+00> : vector<8x8xf32>
    %82 = tpu.matmul %80, %81, %cst_26 {dimension_numbers = #tpu.dot_dimension_numbers<[1], [1], [0], [0], [0, 0, 1, 0], [], []>} : vector<8x8xbf16>, vector<8x8xbf16>, vector<8x8xf32> -> vector<8x8xf32>
    %cst_27 = arith.constant 0.353553385 : f32
    %83 = vector.broadcast %cst_27 : f32 to vector<8x8xf32>
    %84 = arith.mulf %82, %83 : vector<8x8xf32>
    %cst_28 = arith.constant -1.000000e+30 : f32
    %85 = vector.broadcast %cst_28 : f32 to vector<8x8xf32>
    %86 = arith.select %20, %84, %85 : vector<8x8xi1>, vector<8x8xf32>
    %cst_29 = arith.constant dense<0xFF800000> : vector<8xf32>
    %87 = vector.multi_reduction <maximumf>, %86, %cst_29 [1] : vector<8x8xf32> to vector<8xf32>
    %88 = vector.shape_cast %87 : vector<8xf32> to vector<8x1xf32>
    %89 = vector.broadcast %88 : vector<8x1xf32> to vector<8x8xf32>
    %90 = arith.subf %86, %89 : vector<8x8xf32>
    %91 = math.exp %90 : vector<8x8xf32>
    %cst_30 = arith.constant dense<0.000000e+00> : vector<8xf32>
    %92 = vector.multi_reduction <add>, %91, %cst_30 [1] : vector<8x8xf32> to vector<8xf32>
    %93 = vector.shape_cast %92 : vector<8xf32> to vector<8x1xf32>
    %94 = tpu.reciprocal %93 {approx = true} : vector<8x1xf32> -> vector<8x1xf32>
    %95 = vector.broadcast %94 : vector<8x1xf32> to vector<8x8xf32>
    %96 = arith.mulf %91, %95 : vector<8x8xf32>
    %97 = arith.truncf %96 : vector<8x8xf32> to vector<8x8xbf16>
    %98 = arith.truncf %79 : vector<8x8xf32> to vector<8x8xbf16>
    %cst_31 = arith.constant dense<0.000000e+00> : vector<8x8xf32>
    %99 = tpu.matmul %97, %98, %cst_31 {dimension_numbers = #tpu.dot_dimension_numbers<[1], [0], [0], [1], [0, 0, 1, 1], [], []>} : vector<8x8xbf16>, vector<8x8xbf16>, vector<8x8xf32> -> vector<8x8xf32>
    %100 = arith.truncf %99 : vector<8x8xf32> to vector<8x8xbf16>
    %101 = vector.extract_strided_slice %21 {offsets = [16, 0], sizes = [8, 32], strides = [1, 1]} : vector<32x32xbf16> to vector<8x32xbf16>
    %cst_32 = arith.constant dense<0.000000e+00> : vector<8x32xf32>
    %102 = tpu.matmul %100, %101, %cst_32 {dimension_numbers = #tpu.dot_dimension_numbers<[1], [0], [0], [1], [0, 0, 1, 1], [], []>} : vector<8x8xbf16>, vector<8x32xbf16>, vector<8x32xf32> -> vector<8x32xf32>
    %103 = arith.addf %76, %102 : vector<8x32xf32>
    %104 = vector.extract_strided_slice %17 {offsets = [0, 24], sizes = [8, 8], strides = [1, 1]} : vector<8x96xf32> to vector<8x8xf32>
    %105 = vector.extract_strided_slice %17 {offsets = [0, 56], sizes = [8, 8], strides = [1, 1]} : vector<8x96xf32> to vector<8x8xf32>
    %106 = vector.extract_strided_slice %17 {offsets = [0, 88], sizes = [8, 8], strides = [1, 1]} : vector<8x96xf32> to vector<8x8xf32>
    %107 = arith.truncf %104 : vector<8x8xf32> to vector<8x8xbf16>
    %108 = arith.truncf %105 : vector<8x8xf32> to vector<8x8xbf16>
    %cst_33 = arith.constant dense<0.000000e+00> : vector<8x8xf32>
    %109 = tpu.matmul %107, %108, %cst_33 {dimension_numbers = #tpu.dot_dimension_numbers<[1], [1], [0], [0], [0, 0, 1, 0], [], []>} : vector<8x8xbf16>, vector<8x8xbf16>, vector<8x8xf32> -> vector<8x8xf32>
    %cst_34 = arith.constant 0.353553385 : f32
    %110 = vector.broadcast %cst_34 : f32 to vector<8x8xf32>
    %111 = arith.mulf %109, %110 : vector<8x8xf32>
    %cst_35 = arith.constant -1.000000e+30 : f32
    %112 = vector.broadcast %cst_35 : f32 to vector<8x8xf32>
    %113 = arith.select %20, %111, %112 : vector<8x8xi1>, vector<8x8xf32>
    %cst_36 = arith.constant dense<0xFF800000> : vector<8xf32>
    %114 = vector.multi_reduction <maximumf>, %113, %cst_36 [1] : vector<8x8xf32> to vector<8xf32>
    %115 = vector.shape_cast %114 : vector<8xf32> to vector<8x1xf32>
    %116 = vector.broadcast %115 : vector<8x1xf32> to vector<8x8xf32>
    %117 = arith.subf %113, %116 : vector<8x8xf32>
    %118 = math.exp %117 : vector<8x8xf32>
    %cst_37 = arith.constant dense<0.000000e+00> : vector<8xf32>
    %119 = vector.multi_reduction <add>, %118, %cst_37 [1] : vector<8x8xf32> to vector<8xf32>
    %120 = vector.shape_cast %119 : vector<8xf32> to vector<8x1xf32>
    %121 = tpu.reciprocal %120 {approx = true} : vector<8x1xf32> -> vector<8x1xf32>
    %122 = vector.broadcast %121 : vector<8x1xf32> to vector<8x8xf32>
    %123 = arith.mulf %118, %122 : vector<8x8xf32>
    %124 = arith.truncf %123 : vector<8x8xf32> to vector<8x8xbf16>
    %125 = arith.truncf %106 : vector<8x8xf32> to vector<8x8xbf16>
    %cst_38 = arith.constant dense<0.000000e+00> : vector<8x8xf32>
    %126 = tpu.matmul %124, %125, %cst_38 {dimension_numbers = #tpu.dot_dimension_numbers<[1], [0], [0], [1], [0, 0, 1, 1], [], []>} : vector<8x8xbf16>, vector<8x8xbf16>, vector<8x8xf32> -> vector<8x8xf32>
    %127 = arith.truncf %126 : vector<8x8xf32> to vector<8x8xbf16>
    %128 = vector.extract_strided_slice %21 {offsets = [24, 0], sizes = [8, 32], strides = [1, 1]} : vector<32x32xbf16> to vector<8x32xbf16>
    %cst_39 = arith.constant dense<0.000000e+00> : vector<8x32xf32>
    %129 = tpu.matmul %127, %128, %cst_39 {dimension_numbers = #tpu.dot_dimension_numbers<[1], [0], [0], [1], [0, 0, 1, 1], [], []>} : vector<8x8xbf16>, vector<8x32xbf16>, vector<8x32xf32> -> vector<8x32xf32>
    %130 = arith.addf %103, %129 : vector<8x32xf32>
    %131 = arith.addf %1, %130 : vector<8x32xf32>
    %c0_40 = arith.constant 0 : index
    %c0_41 = arith.constant 0 : index
    %132 = vector.load %arg5[%c0_40, %c0_41] : memref<1x32xf32, #tpu.memory_space<vmem>>, vector<1x32xf32>
    %133 = arith.mulf %131, %131 : vector<8x32xf32>
    %cst_42 = arith.constant dense<0.000000e+00> : vector<8xf32>
    %134 = vector.multi_reduction <add>, %133, %cst_42 [1] : vector<8x32xf32> to vector<8xf32>
    %135 = vector.shape_cast %134 : vector<8xf32> to vector<8x1xf32>
    %cst_43 = arith.constant 3.200000e+01 : f32
    %136 = vector.broadcast %cst_43 : f32 to vector<8x1xf32>
    %137 = arith.divf %135, %136 : vector<8x1xf32>
    %cst_44 = arith.constant 9.99999997E-7 : f32
    %138 = vector.broadcast %cst_44 : f32 to vector<8x1xf32>
    %139 = arith.addf %137, %138 : vector<8x1xf32>
    %140 = math.rsqrt %139 : vector<8x1xf32>
    %141 = vector.broadcast %140 : vector<8x1xf32> to vector<8x32xf32>
    %142 = arith.mulf %131, %141 : vector<8x32xf32>
    %143 = vector.broadcast %132 : vector<1x32xf32> to vector<8x32xf32>
    %144 = arith.mulf %142, %143 : vector<8x32xf32>
    %145 = arith.truncf %144 : vector<8x32xf32> to vector<8x32xbf16>
    %c0_45 = arith.constant 0 : index
    %c0_46 = arith.constant 0 : index
    %146 = vector.load %arg6[%c0_45, %c0_46] : memref<32x64xbf16, #tpu.memory_space<vmem>>, vector<32x64xbf16>
    %cst_47 = arith.constant dense<0.000000e+00> : vector<8x64xf32>
    %147 = tpu.matmul %145, %146, %cst_47 {dimension_numbers = #tpu.dot_dimension_numbers<[1], [0], [0], [1], [0, 0, 1, 1], [], []>} : vector<8x32xbf16>, vector<32x64xbf16>, vector<8x64xf32> -> vector<8x64xf32>
    %c0_48 = arith.constant 0 : index
    %c0_49 = arith.constant 0 : index
    %148 = vector.load %arg7[%c0_48, %c0_49] : memref<32x64xbf16, #tpu.memory_space<vmem>>, vector<32x64xbf16>
    %cst_50 = arith.constant dense<0.000000e+00> : vector<8x64xf32>
    %149 = tpu.matmul %145, %148, %cst_50 {dimension_numbers = #tpu.dot_dimension_numbers<[1], [0], [0], [1], [0, 0, 1, 1], [], []>} : vector<8x32xbf16>, vector<32x64xbf16>, vector<8x64xf32> -> vector<8x64xf32>
    %150 = arith.negf %147 : vector<8x64xf32>
    %151 = math.exp %150 : vector<8x64xf32>
    %cst_51 = arith.constant 1.000000e+00 : f32
    %152 = vector.broadcast %cst_51 : f32 to vector<8x64xf32>
    %153 = arith.addf %152, %151 : vector<8x64xf32>
    %154 = arith.divf %152, %153 : vector<8x64xf32>
    %155 = arith.mulf %147, %154 : vector<8x64xf32>
    %156 = arith.mulf %155, %149 : vector<8x64xf32>
    %157 = arith.truncf %156 : vector<8x64xf32> to vector<8x64xbf16>
    %c0_52 = arith.constant 0 : index
    %c0_53 = arith.constant 0 : index
    %158 = vector.load %arg8[%c0_52, %c0_53] : memref<64x32xbf16, #tpu.memory_space<vmem>>, vector<64x32xbf16>
    %cst_54 = arith.constant dense<0.000000e+00> : vector<8x32xf32>
    %159 = tpu.matmul %157, %158, %cst_54 {dimension_numbers = #tpu.dot_dimension_numbers<[1], [0], [0], [1], [0, 0, 1, 1], [], []>} : vector<8x64xbf16>, vector<64x32xbf16>, vector<8x32xf32> -> vector<8x32xf32>
    %160 = arith.addf %131, %159 : vector<8x32xf32>
    %c0_55 = arith.constant 0 : index
    %c0_56 = arith.constant 0 : index
    %c0_57 = arith.constant 0 : index
    %161 = vector.load %arg9[%c0_55, %c0_56, %c0_57] : memref<1x8x32xf32, #tpu.memory_space<vmem>>, vector<1x8x32xf32>
    %162 = vector.shape_cast %161 : vector<1x8x32xf32> to vector<8x32xf32>
    %163 = vector.shape_cast %160 : vector<8x32xf32> to vector<1x8x32xf32>
    tpu.vector_store %arg9[%c0_55, %c0_56, %c0_57], %163 {strides = array<i32>} : memref<1x8x32xf32, #tpu.memory_space<vmem>>, vector<1x8x32xf32>,
    return
  }
  func.func @transform_0(%arg0: i32) -> (i32, i32, i32) {
    %c0_i32 = arith.constant 0 : i32
    %c0_i32_0 = arith.constant 0 : i32
    %c0_i32_1 = arith.constant 0 : i32
    return %arg0, %c0_i32, %c0_i32_0 : i32, i32, i32
  }
  func.func @transform_1(%arg0: i32) -> (i32, i32) {
    %c0_i32 = arith.constant 0 : i32
    %c0_i32_0 = arith.constant 0 : i32
    %c0_i32_1 = arith.constant 0 : i32
    return %c0_i32, %c0_i32_0 : i32, i32
  }
  func.func @transform_2(%arg0: i32) -> (i32, i32) {
    %c0_i32 = arith.constant 0 : i32
    %c0_i32_0 = arith.constant 0 : i32
    %c0_i32_1 = arith.constant 0 : i32
    return %c0_i32, %c0_i32_0 : i32, i32
  }
  func.func @transform_3(%arg0: i32) -> (i32, i32) {
    %c0_i32 = arith.constant 0 : i32
    %c0_i32_0 = arith.constant 0 : i32
    %c0_i32_1 = arith.constant 0 : i32
    return %c0_i32, %c0_i32_0 : i32, i32
  }
  func.func @transform_4(%arg0: i32) -> (i32, i32) {
    %c0_i32 = arith.constant 0 : i32
    %c0_i32_0 = arith.constant 0 : i32
    %c0_i32_1 = arith.constant 0 : i32
    return %c0_i32, %c0_i32_0 : i32, i32
  }
  func.func @transform_5(%arg0: i32) -> (i32, i32) {
    %c0_i32 = arith.constant 0 : i32
    %c0_i32_0 = arith.constant 0 : i32
    %c0_i32_1 = arith.constant 0 : i32
    return %c0_i32, %c0_i32_0 : i32, i32
  }
  func.func @transform_6(%arg0: i32) -> (i32, i32) {
    %c0_i32 = arith.constant 0 : i32
    %c0_i32_0 = arith.constant 0 : i32
    %c0_i32_1 = arith.constant 0 : i32
    return %c0_i32, %c0_i32_0 : i32, i32
  }
  func.func @transform_7(%arg0: i32) -> (i32, i32) {
    %c0_i32 = arith.constant 0 : i32
    %c0_i32_0 = arith.constant 0 : i32
    %c0_i32_1 = arith.constant 0 : i32
    return %c0_i32, %c0_i32_0 : i32, i32
  }
  func.func @transform_8(%arg0: i32) -> (i32, i32, i32) {
    %c0_i32 = arith.constant 0 : i32
    %c0_i32_0 = arith.constant 0 : i32
    %c0_i32_1 = arith.constant 0 : i32
    return %arg0, %c0_i32, %c0_i32_0 : i32, i32, i32
  }
}

</mosaic_0001>

<llo_original>
// kernel: plantgfm_embd_forward.5
$region0: #{plantgfm_embd_forward.5}
  #allocation0 [shape = 'u32[]', space=smem, size = 0x4, offset = 0x4, fixed_abs, tag = 'smem constant byte address 0x4 - core index']
  #allocation1 [shape = 'u32[144,128]{1,0:T(1,128)}', space=vmem, size = 0x12000, scoped, tag = 'internal scratch']
  %s0 = inlined_call_operand.vmem [shape: f32[2,8,32], index: 0, kind: input, shape index: {}]
  %s1 = inlined_call_operand.vmem [shape: f32[1,32], index: 1, kind: input, shape index: {}]
  %s2 = inlined_call_operand.vmem [shape: f32[2,6,32], index: 2, kind: output, shape index: {}]
  %s3 = sld [smem:[#allocation0]]
  $region41: #{plantgfm_embd_forward.5} parent=0
    _
  %s5 = ssub.s32 1, %s3
  %s6 = scalar_select 0, %s5, %s3
  loop: start=0, step=1, limit=4
  $region2: #{plantgfm_embd_forward.5} parent=0 // loop_pre_header
    _
  $region3: #{plantgfm_embd_forward.5} parent=0 // loop_header
    %s8 = sphi 0, %s12
    %p9 = scmp.ge.s32.totalorder %s8, 4
    %s18 = sphi 0, %s20
    %s21 = sphi 0, %s18
    %s22 = sphi 0, %s21
    %s38 = sphi 0, %s22
    %s42 = sphi 0, %s42
    %s44 = sphi 0, %s42
    %s45 = sphi 0, %s44
    %s59 = sphi 0, %s45
    %s65 = sphi 0, %s67
    %s68 = sphi 0, %s65
    %s69 = sphi 0, %s68
    %s85 = sphi 0, %s69
  $region4: #{plantgfm_embd_forward.5} parent=0 // loop_header_branch
    %11 = sbr.rel (%p9) target = $region8
  $region5: #{plantgfm_embd_forward.5} parent=0 // loop_body
    %s13 = ssub.s32 %s8, 1
    %s14 = ssub.s32 %s8, 2
    %s15 = sadd.s32 %s8, 1
    %s16 = ssub.s32 %s8, %s15
    %p17 = scmp.eq.s32.totalorder %s16, 0
    %s19 = sadd.s32 %s18, 1
    %s20 = scalar_select %p17, %s18, %s19
    %p23 = pneg %p17
    %p24 = scmp.eq.s32.totalorder %s8, 1
    %p25 = por %p23, %p24
    %p26 = scmp.ne.s32.totalorder %s18, %s21
    %p27 = scmp.eq.s32.totalorder %s8, 0
    %p28 = por %p26, %p27
    %p29 = scmp.ne.s32.totalorder %s18, %s21
    %p30 = scmp.eq.s32.totalorder %s13, 1
    %p31 = por %p29, %p30
    %p32 = scmp.ne.s32.totalorder %s21, %s22
    %p33 = scmp.eq.s32.totalorder %s13, 0
    %p34 = por %p32, %p33
    %p35 = scmp.ne.s32.totalorder %s21, %s22
    %p36 = scmp.eq.s32.totalorder %s14, 1
    %p37 = por %p35, %p36
    %p39 = scmp.ne.s32.totalorder %s22, %s38
    %p40 = scmp.eq.s32.totalorder %s14, 0
    %p41 = por %p39, %p40
    %s43 = sadd.s32 %s42, 1
    %p46 = scmp.eq.s32.totalorder %s8, 1
    %p47 = scmp.ne.s32.totalorder %s42, %s44
    %p48 = scmp.eq.s32.totalorder %s8, 0
    %p49 = por %p47, %p48
    %p50 = scmp.ne.s32.totalorder %s42, %s44
    %p51 = scmp.eq.s32.totalorder %s13, 1
    %p52 = por %p50, %p51
    %p53 = scmp.ne.s32.totalorder %s44, %s45
    %p54 = scmp.eq.s32.totalorder %s13, 0
    %p55 = por %p53, %p54
    %p56 = scmp.ne.s32.totalorder %s44, %s45
    %p57 = scmp.eq.s32.totalorder %s14, 1
    %p58 = por %p56, %p57
    %p60 = scmp.ne.s32.totalorder %s45, %s59
    %p61 = scmp.eq.s32.totalorder %s14, 0
    %p62 = por %p60, %p61
    %s63 = ssub.s32 %s8, %s15
    %p64 = scmp.eq.s32.totalorder %s63, 0
    %s66 = sadd.s32 %s65, 1
    %s67 = scalar_select %p64, %s65, %s66
    %p70 = pneg %p64
    %p71 = scmp.eq.s32.totalorder %s8, 1
    %p72 = por %p70, %p71
    %p73 = scmp.ne.s32.totalorder %s65, %s68
    %p74 = scmp.eq.s32.totalorder %s8, 0
    %p75 = por %p73, %p74
    %p76 = scmp.ne.s32.totalorder %s65, %s68
    %p77 = scmp.eq.s32.totalorder %s13, 1
    %p78 = por %p76, %p77
    %p79 = scmp.ne.s32.totalorder %s68, %s69
    %p80 = scmp.eq.s32.totalorder %s13, 0
    %p81 = por %p79, %p80
    %p82 = scmp.ne.s32.totalorder %s68, %s69
    %p83 = scmp.eq.s32.totalorder %s14, 1
    %p84 = por %p82, %p83
    %p86 = scmp.ne.s32.totalorder %s69, %s85
    %p87 = scmp.eq.s32.totalorder %s14, 0
    %p88 = por %p86, %p87
    %p89 = scmp.le.s32.totalorder 1, %s8
    %p90 = scmp.lt.s32.totalorder %s8, 3
    %p91 = pnand %p89, %p90
    %p92 = pneg %p91
    // Predicated region
    $region9: #{plantgfm_embd_forward.5} parent=5 // pred_check
      _
    $region10: #{plantgfm_embd_forward.5} parent=5 // pred_check_branch
      %94 = sbr.rel (%p91) target = $region12
    $region11: #{plantgfm_embd_forward.5} parent=5 // pred_region
      %s95 = ssub.s32 %s8, 1
      // Predicated region
      $region13: #{plantgfm_embd_forward.5} parent=11 // pred_check
        %p96 = pneg %p55
      $region14: #{plantgfm_embd_forward.5} parent=11 // pred_check_branch
        %98 = sbr.rel (%p96) target = $region16
      $region15: #{plantgfm_embd_forward.5} parent=11 // pred_region
        _
      $region16: #{plantgfm_embd_forward.5} parent=11 // pred_fallthru
        _
    $region12: #{plantgfm_embd_forward.5} parent=5 // pred_fallthru
      _
    %p99 = scmp.lt.s32.totalorder %s8, 2
    // Predicated region
    $region17: #{plantgfm_embd_forward.5} parent=5 // pred_check
      %p100 = pneg %p99
    $region18: #{plantgfm_embd_forward.5} parent=5 // pred_check_branch
      %102 = sbr.rel (%p100) target = $region20
    $region19: #{plantgfm_embd_forward.5} parent=5 // pred_region
      // Predicated region
      $region21: #{plantgfm_embd_forward.5} parent=19 // pred_check
        %p103 = pneg %p28
      $region22: #{plantgfm_embd_forward.5} parent=19 // pred_check_branch
        %105 = sbr.rel (%p103) target = $region24
      $region23: #{plantgfm_embd_forward.5} parent=19 // pred_region
        %p106 = scmp.lt.s32.totalorder %s8, 1
        %s107 = scalar_select %p106, %s8, 1
        %s108 = smul.addr %s107, 8
        %s109 = scalar_lea.vmem %s0, %s108
      $region24: #{plantgfm_embd_forward.5} parent=19 // pred_fallthru
        _
    $region20: #{plantgfm_embd_forward.5} parent=5 // pred_fallthru
      _
    %p110 = scmp.le.s32.totalorder 1, %s8
    %p111 = scmp.lt.s32.totalorder %s8, 3
    %p112 = pnand %p110, %p111
    %p113 = pneg %p112
    // Predicated region
    $region25: #{plantgfm_embd_forward.5} parent=5 // pred_check
      _
    $region26: #{plantgfm_embd_forward.5} parent=5 // pred_check_branch
      %115 = sbr.rel (%p112) target = $region28
    $region27: #{plantgfm_embd_forward.5} parent=5 // pred_region
      %s116 = ssub.s32 %s8, 1
      %p117 = scmp.lt.s32.totalorder %s13, 1
      %s118 = scalar_select %p117, %s13, 1
      %s119 = smul.addr %s118, 8
      %s120 = scalar_lea.vmem %s0, %s119
      %p121 = pneg %p34
      %p122 = pneg %p31
      %p123 = pneg %p55
      %p124 = pneg %p52
      %p125 = pneg %p81
      %p126 = pneg %p78
      %p127 = scmp.lt.s32.totalorder %s13, 1
      %s128 = scalar_select %p127, %s13, 1
      %s129 = smul.addr %s128, 8
      %s130 = scalar_lea.vmem %s2, %s129
      %p131 = scmp.lt.s32.totalorder %s13, 1
      %s132 = scalar_select %p131, %s13, 1
      %s133 = smul.addr %s132, 8
      %s134 = scalar_lea.vmem %s0, %s133
      %p135 = scmp.lt.s32.totalorder %s13, 1
      %s136 = scalar_select %p135, %s13, 1
      %s137 = smul.addr %s136, 8
      %s138 = scalar_lea.vmem %s2, %s137
      %v139 = vld [vmem:[%s134] sm:$0xff]
      %v140 = vmul.f32 %v139, %v139
      %vm141 = vcmask 260097
      %v142 = vsel %vm141, %v140, 0.0
      %143 = vadd.xlane.f32.xlu0 %v142
      %v144 = vpop.xlane.xlu0 %143
      %v145 = vrcp.pop 32.0
      %v146 = vmul.f32 %v144, %v145
      %v147 = vadd.f32 %v146, 1e-06
      %v148 = vrsqrt.pop %v147
      %v149 = vmul.f32 %v139, %v148
      %v150 = vld [vmem:[%s1] sm:$0x1]
      %v152 = vlaneseq
      %v153 = vshrl.u32 %v152, 7
      %v154 = vsub.s32 0, %v153
      %v155 = vrot.slane %v150, %v154
      %v157 = vmul.f32 %v149, %v155
      %158 = vst.msk [vmem:[%s138 - $0x1] sm:$0x7e] %vm141, %v157
      %p159 = scmp.lt.s32.totalorder %s13, 1
      %s160 = scalar_select %p159, %s13, 1
      %s161 = smul.addr %s160, 8
      %s162 = scalar_lea.vmem %s2, %s161
      // Predicated region
      $region29: #{plantgfm_embd_forward.5} parent=27 // pred_check
        %p163 = pneg %p78
      $region30: #{plantgfm_embd_forward.5} parent=27 // pred_check_branch
        %165 = sbr.rel (%p163) target = $region32
      $region31: #{plantgfm_embd_forward.5} parent=27 // pred_region
        _
      $region32: #{plantgfm_embd_forward.5} parent=27 // pred_fallthru
        _
    $region28: #{plantgfm_embd_forward.5} parent=5 // pred_fallthru
      _
    %p166 = scmp.le.s32.totalorder 2, %s8
    // Predicated region
    $region33: #{plantgfm_embd_forward.5} parent=5 // pred_check
      %p167 = pneg %p166
    $region34: #{plantgfm_embd_forward.5} parent=5 // pred_check_branch
      %169 = sbr.rel (%p167) target = $region36
    $region35: #{plantgfm_embd_forward.5} parent=5 // pred_region
      %s170 = ssub.s32 %s8, 2
      // Predicated region
      $region37: #{plantgfm_embd_forward.5} parent=35 // pred_check
        %p171 = pneg %p84
      $region38: #{plantgfm_embd_forward.5} parent=35 // pred_check_branch
        %173 = sbr.rel (%p171) target = $region40
      $region39: #{plantgfm_embd_forward.5} parent=35 // pred_region
        %p174 = scmp.lt.s32.totalorder %s14, 1
        %s175 = scalar_select %p174, %s14, 1
        %s176 = smul.addr %s175, 8
        %s177 = scalar_lea.vmem %s2, %s176
      $region40: #{plantgfm_embd_forward.5} parent=35 // pred_fallthru
        _
    $region36: #{plantgfm_embd_forward.5} parent=5 // pred_fallthru
      _
  $region6: #{plantgfm_embd_forward.5} parent=0 // loop_footer
    %s12 = sadd.s32 1, %s8
  $region7: #{plantgfm_embd_forward.5} parent=0 // loop_footer_branch
    %7 = sbr.rel target = $region3
  $region8: #{plantgfm_embd_forward.5} parent=0 // loop_exit
    _

// kernel: plantgfm_embd_forward.3
$region0: #{plantgfm_embd_forward.3}
  #allocation0 [shape = 'u32[]', space=smem, size = 0x4, offset = 0x4, fixed_abs, tag = 'smem constant byte address 0x4 - core index']
  #allocation1 [shape = 'u32[144,128]{1,0:T(1,128)}', space=vmem, size = 0x12000, scoped, tag = 'internal scratch']
  %s0 = inlined_call_operand.vmem [shape: f32[2,8,32], index: 0, kind: input, shape index: {}]
  %s1 = inlined_call_operand.vmem [shape: f32[1,32], index: 1, kind: input, shape index: {}]
  %s2 = inlined_call_operand.vmem [shape: bf16[32,96], index: 2, kind: input, shape index: {}]
  %s3 = inlined_call_operand.vmem [shape: bf16[32,32], index: 3, kind: input, shape index: {}]
  %s4 = inlined_call_operand.vmem [shape: f32[1,32], index: 4, kind: input, shape index: {}]
  %s5 = inlined_call_operand.vmem [shape: bf16[32,64], index: 5, kind: input, shape index: {}]
  %s6 = inlined_call_operand.vmem [shape: bf16[32,64], index: 6, kind: input, shape index: {}]
  %s7 = inlined_call_operand.vmem [shape: bf16[64,32], index: 7, kind: input, shape index: {}]
  %s8 = inlined_call_operand.vmem [shape: f32[2,8,32], index: 8, kind: output, shape index: {}]
  %s9 = sld [smem:[#allocation0]]
  $region65: #{plantgfm_embd_forward.3} parent=0
    _
  %s11 = ssub.s32 1, %s9
  %s12 = scalar_select 0, %s11, %s9
  loop: start=0, step=1, limit=4
  $region2: #{plantgfm_embd_forward.3} parent=0 // loop_pre_header
    _
  $region3: #{plantgfm_embd_forward.3} parent=0 // loop_header
    %s14 = sphi 0, %s18
    %p15 = scmp.ge.s32.totalorder %s14, 4
    %s24 = sphi 0, %s26
    %s27 = sphi 0, %s24
    %s28 = sphi 0, %s27
    %s44 = sphi 0, %s28
    %s48 = sphi 0, %s48
    %s50 = sphi 0, %s48
    %s51 = sphi 0, %s50
    %s65 = sphi 0, %s51
    %s69 = sphi 0, %s69
    %s71 = sphi 0, %s69
    %s72 = sphi 0, %s71
    %s86 = sphi 0, %s72
    %s90 = sphi 0, %s90
    %s92 = sphi 0, %s90
    %s93 = sphi 0, %s92
    %s107 = sphi 0, %s93
    %s111 = sphi 0, %s111
    %s113 = sphi 0, %s111
    %s114 = sphi 0, %s113
    %s128 = sphi 0, %s114
    %s132 = sphi 0, %s132
    %s134 = sphi 0, %s132
    %s135 = sphi 0, %s134
    %s149 = sphi 0, %s135
    %s153 = sphi 0, %s153
    %s155 = sphi 0, %s153
    %s156 = sphi 0, %s155
    %s170 = sphi 0, %s156
    %s174 = sphi 0, %s174
    %s176 = sphi 0, %s174
    %s177 = sphi 0, %s176
    %s191 = sphi 0, %s177
    %s197 = sphi 0, %s199
    %s200 = sphi 0, %s197
    %s201 = sphi 0, %s200
    %s217 = sphi 0, %s201
  $region4: #{plantgfm_embd_forward.3} parent=0 // loop_header_branch
    %17 = sbr.rel (%p15) target = $region8
  $region5: #{plantgfm_embd_forward.3} parent=0 // loop_body
    %s19 = ssub.s32 %s14, 1
    %s20 = ssub.s32 %s14, 2
    %s21 = sadd.s32 %s14, 1
    %s22 = ssub.s32 %s14, %s21
    %p23 = scmp.eq.s32.totalorder %s22, 0
    %s25 = sadd.s32 %s24, 1
    %s26 = scalar_select %p23, %s24, %s25
    %p29 = pneg %p23
    %p30 = scmp.eq.s32.totalorder %s14, 1
    %p31 = por %p29, %p30
    %p32 = scmp.ne.s32.totalorder %s24, %s27
    %p33 = scmp.eq.s32.totalorder %s14, 0
    %p34 = por %p32, %p33
    %p35 = scmp.ne.s32.totalorder %s24, %s27
    %p36 = scmp.eq.s32.totalorder %s19, 1
    %p37 = por %p35, %p36
    %p38 = scmp.ne.s32.totalorder %s27, %s28
    %p39 = scmp.eq.s32.totalorder %s19, 0
    %p40 = por %p38, %p39
    %p41 = scmp.ne.s32.totalorder %s27, %s28
    %p42 = scmp.eq.s32.totalorder %s20, 1
    %p43 = por %p41, %p42
    %p45 = scmp.ne.s32.totalorder %s28, %s44
    %p46 = scmp.eq.s32.totalorder %s20, 0
    %p47 = por %p45, %p46
    %s49 = sadd.s32 %s48, 1
    %p52 = scmp.eq.s32.totalorder %s14, 1
    %p53 = scmp.ne.s32.totalorder %s48, %s50
    %p54 = scmp.eq.s32.totalorder %s14, 0
    %p55 = por %p53, %p54
    %p56 = scmp.ne.s32.totalorder %s48, %s50
    %p57 = scmp.eq.s32.totalorder %s19, 1
    %p58 = por %p56, %p57
    %p59 = scmp.ne.s32.totalorder %s50, %s51
    %p60 = scmp.eq.s32.totalorder %s19, 0
    %p61 = por %p59, %p60
    %p62 = scmp.ne.s32.totalorder %s50, %s51
    %p63 = scmp.eq.s32.totalorder %s20, 1
    %p64 = por %p62, %p63
    %p66 = scmp.ne.s32.totalorder %s51, %s65
    %p67 = scmp.eq.s32.totalorder %s20, 0
    %p68 = por %p66, %p67
    %s70 = sadd.s32 %s69, 1
    %p73 = scmp.eq.s32.totalorder %s14, 1
    %p74 = scmp.ne.s32.totalorder %s69, %s71
    %p75 = scmp.eq.s32.totalorder %s14, 0
    %p76 = por %p74, %p75
    %p77 = scmp.ne.s32.totalorder %s69, %s71
    %p78 = scmp.eq.s32.totalorder %s19, 1
    %p79 = por %p77, %p78
    %p80 = scmp.ne.s32.totalorder %s71, %s72
    %p81 = scmp.eq.s32.totalorder %s19, 0
    %p82 = por %p80, %p81
    %p83 = scmp.ne.s32.totalorder %s71, %s72
    %p84 = scmp.eq.s32.totalorder %s20, 1
    %p85 = por %p83, %p84
    %p87 = scmp.ne.s32.totalorder %s72, %s86
    %p88 = scmp.eq.s32.totalorder %s20, 0
    %p89 = por %p87, %p88
    %s91 = sadd.s32 %s90, 1
    %p94 = scmp.eq.s32.totalorder %s14, 1
    %p95 = scmp.ne.s32.totalorder %s90, %s92
    %p96 = scmp.eq.s32.totalorder %s14, 0
    %p97 = por %p95, %p96
    %p98 = scmp.ne.s32.totalorder %s90, %s92
    %p99 = scmp.eq.s32.totalorder %s19, 1
    %p100 = por %p98, %p99
    %p101 = scmp.ne.s32.totalorder %s92, %s93
    %p102 = scmp.eq.s32.totalorder %s19, 0
    %p103 = por %p101, %p102
    %p104 = scmp.ne.s32.totalorder %s92, %s93
    %p105 = scmp.eq.s32.totalorder %s20, 1
    %p106 = por %p104, %p105
    %p108 = scmp.ne.s32.totalorder %s93, %s107
    %p109 = scmp.eq.s32.totalorder %s20, 0
    %p110 = por %p108, %p109
    %s112 = sadd.s32 %s111, 1
    %p115 = scmp.eq.s32.totalorder %s14, 1
    %p116 = scmp.ne.s32.totalorder %s111, %s113
    %p117 = scmp.eq.s32.totalorder %s14, 0
    %p118 = por %p116, %p117
    %p119 = scmp.ne.s32.totalorder %s111, %s113
    %p120 = scmp.eq.s32.totalorder %s19, 1
    %p121 = por %p119, %p120
    %p122 = scmp.ne.s32.totalorder %s113, %s114
    %p123 = scmp.eq.s32.totalorder %s19, 0
    %p124 = por %p122, %p123
    %p125 = scmp.ne.s32.totalorder %s113, %s114
    %p126 = scmp.eq.s32.totalorder %s20, 1
    %p127 = por %p125, %p126
    %p129 = scmp.ne.s32.totalorder %s114, %s128
    %p130 = scmp.eq.s32.totalorder %s20, 0
    %p131 = por %p129, %p130
    %s133 = sadd.s32 %s132, 1
    %p136 = scmp.eq.s32.totalorder %s14, 1
    %p137 = scmp.ne.s32.totalorder %s132, %s134
    %p138 = scmp.eq.s32.totalorder %s14, 0
    %p139 = por %p137, %p138
    %p140 = scmp.ne.s32.totalorder %s132, %s134
    %p141 = scmp.eq.s32.totalorder %s19, 1
    %p142 = por %p140, %p141
    %p143 = scmp.ne.s32.totalorder %s134, %s135
    %p144 = scmp.eq.s32.totalorder %s19, 0
    %p145 = por %p143, %p144
    %p146 = scmp.ne.s32.totalorder %s134, %s135
    %p147 = scmp.eq.s32.totalorder %s20, 1
    %p148 = por %p146, %p147
    %p150 = scmp.ne.s32.totalorder %s135, %s149
    %p151 = scmp.eq.s32.totalorder %s20, 0
    %p152 = por %p150, %p151
    %s154 = sadd.s32 %s153, 1
    %p157 = scmp.eq.s32.totalorder %s14, 1
    %p158 = scmp.ne.s32.totalorder %s153, %s155
    %p159 = scmp.eq.s32.totalorder %s14, 0
    %p160 = por %p158, %p159
    %p161 = scmp.ne.s32.totalorder %s153, %s155
    %p162 = scmp.eq.s32.totalorder %s19, 1
    %p163 = por %p161, %p162
    %p164 = scmp.ne.s32.totalorder %s155, %s156
    %p165 = scmp.eq.s32.totalorder %s19, 0
    %p166 = por %p164, %p165
    %p167 = scmp.ne.s32.totalorder %s155, %s156
    %p168 = scmp.eq.s32.totalorder %s20, 1
    %p169 = por %p167, %p168
    %p171 = scmp.ne.s32.totalorder %s156, %s170
    %p172 = scmp.eq.s32.totalorder %s20, 0
    %p173 = por %p171, %p172
    %s175 = sadd.s32 %s174, 1
    %p178 = scmp.eq.s32.totalorder %s14, 1
    %p179 = scmp.ne.s32.totalorder %s174, %s176
    %p180 = scmp.eq.s32.totalorder %s14, 0
    %p181 = por %p179, %p180
    %p182 = scmp.ne.s32.totalorder %s174, %s176
    %p183 = scmp.eq.s32.totalorder %s19, 1
    %p184 = por %p182, %p183
    %p185 = scmp.ne.s32.totalorder %s176, %s177
    %p186 = scmp.eq.s32.totalorder %s19, 0
    %p187 = por %p185, %p186
    %p188 = scmp.ne.s32.totalorder %s176, %s177
    %p189 = scmp.eq.s32.totalorder %s20, 1
    %p190 = por %p188, %p189
    %p192 = scmp.ne.s32.totalorder %s177, %s191
    %p193 = scmp.eq.s32.totalorder %s20, 0
    %p194 = por %p192, %p193
    %s195 = ssub.s32 %s14, %s21
    %p196 = scmp.eq.s32.totalorder %s195, 0
    %s198 = sadd.s32 %s197, 1
    %s199 = scalar_select %p196, %s197, %s198
    %p202 = pneg %p196
    %p203 = scmp.eq.s32.totalorder %s14, 1
    %p204 = por %p202, %p203
    %p205 = scmp.ne.s32.totalorder %s197, %s200
    %p206 = scmp.eq.s32.totalorder %s14, 0
    %p207 = por %p205, %p206
    %p208 = scmp.ne.s32.totalorder %s197, %s200
    %p209 = scmp.eq.s32.totalorder %s19, 1
    %p210 = por %p208, %p209
    %p211 = scmp.ne.s32.totalorder %s200, %s201
    %p212 = scmp.eq.s32.totalorder %s19, 0
    %p213 = por %p211, %p212
    %p214 = scmp.ne.s32.totalorder %s200, %s201
    %p215 = scmp.eq.s32.totalorder %s20, 1
    %p216 = por %p214, %p215
    %p218 = scmp.ne.s32.totalorder %s201, %s217
    %p219 = scmp.eq.s32.totalorder %s20, 0
    %p220 = por %p218, %p219
    %p221 = scmp.le.s32.totalorder 1, %s14
    %p222 = scmp.lt.s32.totalorder %s14, 3
    %p223 = pnand %p221, %p222
    %p224 = pneg %p223
    // Predicated region
    $region9: #{plantgfm_embd_forward.3} parent=5 // pred_check
      _
    $region10: #{plantgfm_embd_forward.3} parent=5 // pred_check_branch
      %226 = sbr.rel (%p223) target = $region12
    $region11: #{plantgfm_embd_forward.3} parent=5 // pred_region
      %s227 = ssub.s32 %s14, 1
      // Predicated region
      $region13: #{plantgfm_embd_forward.3} parent=11 // pred_check
        %p228 = pneg %p61
      $region14: #{plantgfm_embd_forward.3} parent=11 // pred_check_branch
        %230 = sbr.rel (%p228) target = $region16
      $region15: #{plantgfm_embd_forward.3} parent=11 // pred_region
        _
      $region16: #{plantgfm_embd_forward.3} parent=11 // pred_fallthru
        _
      // Predicated region
      $region17: #{plantgfm_embd_forward.3} parent=11 // pred_check
        %p231 = pneg %p82
      $region18: #{plantgfm_embd_forward.3} parent=11 // pred_check_branch
        %233 = sbr.rel (%p231) target = $region20
      $region19: #{plantgfm_embd_forward.3} parent=11 // pred_region
        _
      $region20: #{plantgfm_embd_forward.3} parent=11 // pred_fallthru
        _
      // Predicated region
      $region21: #{plantgfm_embd_forward.3} parent=11 // pred_check
        %p234 = pneg %p103
      $region22: #{plantgfm_embd_forward.3} parent=11 // pred_check_branch
        %236 = sbr.rel (%p234) target = $region24
      $region23: #{plantgfm_embd_forward.3} parent=11 // pred_region
        _
      $region24: #{plantgfm_embd_forward.3} parent=11 // pred_fallthru
        _
      // Predicated region
      $region25: #{plantgfm_embd_forward.3} parent=11 // pred_check
        %p237 = pneg %p124
      $region26: #{plantgfm_embd_forward.3} parent=11 // pred_check_branch
        %239 = sbr.rel (%p237) target = $region28
      $region27: #{plantgfm_embd_forward.3} parent=11 // pred_region
        _
      $region28: #{plantgfm_embd_forward.3} parent=11 // pred_fallthru
        _
      // Predicated region
      $region29: #{plantgfm_embd_forward.3} parent=11 // pred_check
        %p240 = pneg %p145
      $region30: #{plantgfm_embd_forward.3} parent=11 // pred_check_branch
        %242 = sbr.rel (%p240) target = $region32
      $region31: #{plantgfm_embd_forward.3} parent=11 // pred_region
        _
      $region32: #{plantgfm_embd_forward.3} parent=11 // pred_fallthru
        _
      // Predicated region
      $region33: #{plantgfm_embd_forward.3} parent=11 // pred_check
        %p243 = pneg %p166
      $region34: #{plantgfm_embd_forward.3} parent=11 // pred_check_branch
        %245 = sbr.rel (%p243) target = $region36
      $region35: #{plantgfm_embd_forward.3} parent=11 // pred_region
        _
      $region36: #{plantgfm_embd_forward.3} parent=11 // pred_fallthru
        _
      // Predicated region
      $region37: #{plantgfm_embd_forward.3} parent=11 // pred_check
        %p246 = pneg %p187
      $region38: #{plantgfm_embd_forward.3} parent=11 // pred_check_branch
        %248 = sbr.rel (%p246) target = $region40
      $region39: #{plantgfm_embd_forward.3} parent=11 // pred_region
        _
      $region40: #{plantgfm_embd_forward.3} parent=11 // pred_fallthru
        _
    $region12: #{plantgfm_embd_forward.3} parent=5 // pred_fallthru
      _
    %p249 = scmp.lt.s32.totalorder %s14, 2
    // Predicated region
    $region41: #{plantgfm_embd_forward.3} parent=5 // pred_check
      %p250 = pneg %p249
    $region42: #{plantgfm_embd_forward.3} parent=5 // pred_check_branch
      %252 = sbr.rel (%p250) target = $region44
    $region43: #{plantgfm_embd_forward.3} parent=5 // pred_region
      // Predicated region
      $region45: #{plantgfm_embd_forward.3} parent=43 // pred_check
        %p253 = pneg %p34
      $region46: #{plantgfm_embd_forward.3} parent=43 // pred_check_branch
        %255 = sbr.rel (%p253) target = $region48
      $region47: #{plantgfm_embd_forward.3} parent=43 // pred_region
        %p256 = scmp.lt.s32.totalorder %s14, 1
        %s257 = scalar_select %p256, %s14, 1
        %s258 = smul.addr %s257, 8
        %s259 = scalar_lea.vmem %s0, %s258
      $region48: #{plantgfm_embd_forward.3} parent=43 // pred_fallthru
        _
    $region44: #{plantgfm_embd_forward.3} parent=5 // pred_fallthru
      _
    %p260 = scmp.le.s32.totalorder 1, %s14
    %p261 = scmp.lt.s32.totalorder %s14, 3
    %p262 = pnand %p260, %p261
    %p263 = pneg %p262
    // Predicated region
    $region49: #{plantgfm_embd_forward.3} parent=5 // pred_check
      _
    $region50: #{plantgfm_embd_forward.3} parent=5 // pred_check_branch
      %265 = sbr.rel (%p262) target = $region52
    $region51: #{plantgfm_embd_forward.3} parent=5 // pred_region
      %s266 = ssub.s32 %s14, 1
      %p267 = scmp.lt.s32.totalorder %s19, 1
      %s268 = scalar_select %p267, %s19, 1
      %s269 = smul.addr %s268, 8
      %s270 = scalar_lea.vmem %s0, %s269
      %p271 = pneg %p40
      %p272 = pneg %p37
      %p273 = pneg %p61
      %p274 = pneg %p58
      %p275 = pneg %p82
      %p276 = pneg %p79
      %p277 = pneg %p103
      %p278 = pneg %p100
      %p279 = pneg %p124
      %p280 = pneg %p121
      %p281 = pneg %p145
      %p282 = pneg %p142
      %p283 = pneg %p166
      %p284 = pneg %p163
      %p285 = pneg %p187
      %p286 = pneg %p184
      %p287 = pneg %p213
      %p288 = pneg %p210
      %p289 = scmp.lt.s32.totalorder %s19, 1
      %s290 = scalar_select %p289, %s19, 1
      %s291 = smul.addr %s290, 8
      %s292 = scalar_lea.vmem %s8, %s291
      %p293 = scmp.lt.s32.totalorder %s19, 1
      %s294 = scalar_select %p293, %s19, 1
      %s295 = smul.addr %s294, 8
      %s296 = scalar_lea.vmem %s0, %s295
      %p297 = scmp.lt.s32.totalorder %s19, 1
      %s298 = scalar_select %p297, %s19, 1
      %s299 = smul.addr %s298, 8
      %s300 = scalar_lea.vmem %s8, %s299
      %v302 = vld [vmem:[%s296] sm:$0xff]
      %v303 = vld [vmem:[%s1] sm:$0x1]
      %v304 = vmul.f32 %v302, %v302
      %vm305 = vcmask 261120
      %v306 = vsel %vm305, %v304, 0.0
      %307 = vadd.xlane.f32.xlu0 %v306
      %v308 = vpop.xlane.xlu0 %307
      %v309 = vrcp.pop 32.0
      %v310 = vmul.f32 %v308, %v309
      %v311 = vadd.f32 %v310, 1e-06
      %v312 = vrsqrt.pop %v311
      %v313 = vmul.f32 %v302, %v312
      %v315 = vlaneseq
      %v316 = vshrl.u32 %v315, 7
      %v317 = vsub.s32 0, %v316
      %v318 = vrot.slane %v303, %v317
      %v320 = vmul.f32 %v313, %v318
      %v321 = vpack.c.bf16 %v320, %v320
      %v322 = vld [vmem:[%s2] sm:$0xf]
      %v323 = vld [vmem:[%s2 + $0x4] sm:$0xf]
      %v324 = vld [vmem:[%s2 + $0x8] sm:$0xf]
      %v325 = vld [vmem:[%s2 + $0xc] sm:$0xf]
      %v330 = vunpack.c.l.b16 %v322
      %v331 = vunpack.c.l.b16 %v323
      %v332 = vunpack.c.l.b16 %v324
      %v333 = vunpack.c.l.b16 %v325
      %v334 = vpack.c.b16 %v331, %v330
      %v335 = vpack.c.b16 %v333, %v332
      %v339 = vsel %vm305, %v321, 0
      %341 = vmatprep.subr.bf16.mxu0 0
      %342 = vmatpush1.bf16.msra.mxu0 %v334
      %343 = vmatprep.subr.bf16.mxu0 0
      %344 = vmatpush1.bf16.msra.mxu0 %v335
      %345 = vmatprep.subr.bf16.mxu0 0
      %346 = vmatpush1.bf16.msra.mxu0 0
      %347 = vmatprep.subr.bf16.mxu0 0
      %348 = vmatpush1.bf16.msra.mxu0 0
      %349 = vmatprep.subr.bf16.mxu0 0
      %350 = vmatpush1.bf16.msra.mxu0 0
      %351 = vmatprep.subr.bf16.mxu0 0
      %352 = vmatpush1.bf16.msra.mxu0 0
      %353 = vmatprep.subr.bf16.mxu0 0
      %354 = vmatpush1.bf16.msra.mxu0 0
      %355 = vmatprep.subr.bf16.mxu0 0
      %356 = vmatpush1.bf16.msra.mxu0 0
      %357 = vmatprep.subr.bf16.mxu0 0
      %358 = vmatpush1.bf16.msra.mxu0 0
      %359 = vmatprep.subr.bf16.mxu0 0
      %360 = vmatpush1.bf16.msra.mxu0 0
      %361 = vmatprep.subr.bf16.mxu0 0
      %362 = vmatpush1.bf16.msra.mxu0 0
      %363 = vmatprep.subr.bf16.mxu0 0
      %364 = vmatpush1.bf16.msra.mxu0 0
      %365 = vmatprep.subr.bf16.mxu0 0
      %366 = vmatpush1.bf16.msra.mxu0 0
      %367 = vmatprep.subr.bf16.mxu0 0
      %368 = vmatpush1.bf16.msra.mxu0 0
      %369 = vmatprep.subr.bf16.mxu0 0
      %370 = vmatpush1.bf16.msra.mxu0 0
      %371 = vmatprep.subr.bf16.mxu0 0
      %372 = vmatpush1.bf16.msra.mxu0 0
      %373 = vmatprep.mubr.bf16.mxu0 0
      %374 = vmatmul.mubr.bf16.gmra.mrb[0].mxu0 %v339
      %v375 = vpop.f32.mrb[0].mxu0
      %v376 = vadd.f32 0.0, %v375
      %v377 = vpop.f32.mrb[0].mxu0
      %v378 = vpop.f32.mrb[0].mxu0
      %v379 = vpop.f32.mrb[0].mxu0
      %380 = vdwg.mxu0
      %v381 = vlaneseq
      %v382 = vshrl.u32 %v381, 7
      %v383 = vlaneseq
      %v384 = vand.u32 %v383, 127
      %vm385 = vcmp.le.s32.totalorder %v384, %v382
      %v386 = vld [vmem:[%s3] sm:$0xf]
      %v387 = vld [vmem:[%s3 + $0x4] sm:$0xf]
      %v388 = vld [vmem:[%s3 + $0x8] sm:$0xf]
      %v389 = vld [vmem:[%s3 + $0xc] sm:$0xf]
      %v390 = vpack.c.bf16 %v376, %v376
      %392 = vrot.lane.b32.xlu0 %v390, 96
      %v393 = vpop.permute.xlu0 %392
      %vm394 = vcmask 64512
      %v396 = vsel %vm394, %v390, 0
      %v399 = vsel %vm394, %v393, 0
      %401 = vmatprep.subr.bf16.mxu0 0
      %402 = vmatpush1.bf16.xpose.msra.mxu0 %v399
      %403 = vmatprep.subr.bf16.mxu0 0
      %404 = vmatpush1.bf16.xpose.msra.mxu0 0
      %405 = vmatprep.subr.bf16.mxu0 0
      %406 = vmatpush1.bf16.xpose.msra.mxu0 0
      %407 = vmatprep.subr.bf16.mxu0 0
      %408 = vmatpush1.bf16.xpose.msra.mxu0 0
      %409 = vmatprep.subr.bf16.mxu0 0
      %410 = vmatpush1.bf16.xpose.msra.mxu0 0
      %411 = vmatprep.subr.bf16.mxu0 0
      %412 = vmatpush1.bf16.xpose.msra.mxu0 0
      %413 = vmatprep.subr.bf16.mxu0 0
      %414 = vmatpush1.bf16.xpose.msra.mxu0 0
      %415 = vmatprep.subr.bf16.mxu0 0
      %416 = vmatpush1.bf16.xpose.msra.mxu0 0
      %417 = vmatprep.subr.bf16.mxu0 0
      %418 = vmatpush1.bf16.xpose.msra.mxu0 0
      %419 = vmatprep.subr.bf16.mxu0 0
      %420 = vmatpush1.bf16.xpose.msra.mxu0 0
      %421 = vmatprep.subr.bf16.mxu0 0
      %422 = vmatpush1.bf16.xpose.msra.mxu0 0
      %423 = vmatprep.subr.bf16.mxu0 0
      %424 = vmatpush1.bf16.xpose.msra.mxu0 0
      %425 = vmatprep.subr.bf16.mxu0 0
      %426 = vmatpush1.bf16.xpose.msra.mxu0 0
      %427 = vmatprep.subr.bf16.mxu0 0
      %428 = vmatpush1.bf16.xpose.msra.mxu0 0
      %429 = vmatprep.subr.bf16.mxu0 0
      %430 = vmatpush1.bf16.xpose.msra.mxu0 0
      %431 = vmatprep.subr.bf16.mxu0 0
      %432 = vmatpush1.bf16.xpose.msra.mxu0 0
      %433 = vmatprep.mubr.bf16.mxu0 0
      %434 = vmatmul.mubr.bf16.gmra.mrb[0].mxu0 %v396
      %v435 = vpop.f32.mrb[0].mxu0
      %v436 = vadd.f32 0.0, %v435
      %v437 = vpop.f32.mrb[0].mxu0
      %v438 = vpop.f32.mrb[0].mxu0
      %v439 = vpop.f32.mrb[0].mxu0
      %440 = vdwg.mxu0
      %v441 = vmul.f32 %v436, 0.35355338
      %v442 = vsel %vm385, %v441, -1e+30
      %v443 = vsel %vm394, %v442, -inf
      %444 = vmax.xlane.f32.xlu0 %v443
      %v445 = vpop.xlane.xlu0 %444
      %v446 = vsub.f32 %v442, %v445
      %v447 = vmul.f32 %v446, 1.442695
      %v448 = vpow.pop %v447
      %v449 = vsel %vm394, %v448, 0.0
      %450 = vadd.xlane.f32.xlu0 %v449
      %v451 = vpop.xlane.xlu0 %450
      %v452 = vrcp.pop %v451
      %v453 = vmul.f32 %v448, %v452
      %v454 = vpack.c.bf16 %v453, %v453
      %455 = vrot.lane.b32.xlu0 %v390, 64
      %v456 = vpop.permute.xlu0 %455
      %v458 = vsel %vm394, %v454, 0
      %vm460 = vcmask 1043456
      %v462 = vsel %vm460, %v456, 0
      %464 = vmatprep.subr.bf16.mxu0 0
      %465 = vmatpush1.bf16.msra.mxu0 %v462
      %466 = vmatprep.subr.bf16.mxu0 0
      %467 = vmatpush1.bf16.msra.mxu0 0
      %468 = vmatprep.subr.bf16.mxu0 0
      %469 = vmatpush1.bf16.msra.mxu0 0
      %470 = vmatprep.subr.bf16.mxu0 0
      %471 = vmatpush1.bf16.msra.mxu0 0
      %472 = vmatprep.subr.bf16.mxu0 0
      %473 = vmatpush1.bf16.msra.mxu0 0
      %474 = vmatprep.subr.bf16.mxu0 0
      %475 = vmatpush1.bf16.msra.mxu0 0
      %476 = vmatprep.subr.bf16.mxu0 0
      %477 = vmatpush1.bf16.msra.mxu0 0
      %478 = vmatprep.subr.bf16.mxu0 0
      %479 = vmatpush1.bf16.msra.mxu0 0
      %480 = vmatprep.subr.bf16.mxu0 0
      %481 = vmatpush1.bf16.msra.mxu0 0
      %482 = vmatprep.subr.bf16.mxu0 0
      %483 = vmatpush1.bf16.msra.mxu0 0
      %484 = vmatprep.subr.bf16.mxu0 0
      %485 = vmatpush1.bf16.msra.mxu0 0
      %486 = vmatprep.subr.bf16.mxu0 0
      %487 = vmatpush1.bf16.msra.mxu0 0
      %488 = vmatprep.subr.bf16.mxu0 0
      %489 = vmatpush1.bf16.msra.mxu0 0
      %490 = vmatprep.subr.bf16.mxu0 0
      %491 = vmatpush1.bf16.msra.mxu0 0
      %492 = vmatprep.subr.bf16.mxu0 0
      %493 = vmatpush1.bf16.msra.mxu0 0
      %494 = vmatprep.subr.bf16.mxu0 0
      %495 = vmatpush1.bf16.msra.mxu0 0
      %496 = vmatprep.mubr.bf16.mxu0 0
      %497 = vmatmul.mubr.bf16.gmra.mrb[0].mxu0 %v458
      %v498 = vpop.f32.mrb[0].mxu0
      %v499 = vadd.f32 0.0, %v498
      %v500 = vpop.f32.mrb[0].mxu0
      %v501 = vpop.f32.mrb[0].mxu0
      %v502 = vpop.f32.mrb[0].mxu0
      %503 = vdwg.mxu0
      %v504 = vpack.c.bf16 %v499, %v499
      %505 = vrot.lane.b32.xlu0 %v390, 120
      %v506 = vpop.permute.xlu0 %505
      %507 = vrot.lane.b32.xlu0 %v390, 88
      %v508 = vpop.permute.xlu0 %507
      %v510 = vsel %vm394, %v506, 0
      %v513 = vsel %vm394, %v508, 0
      %515 = vmatprep.subr.bf16.mxu0 0
      %516 = vmatpush1.bf16.xpose.msra.mxu0 %v513
      %517 = vmatprep.subr.bf16.mxu0 0
      %518 = vmatpush1.bf16.xpose.msra.mxu0 0
      %519 = vmatprep.subr.bf16.mxu0 0
      %520 = vmatpush1.bf16.xpose.msra.mxu0 0
      %521 = vmatprep.subr.bf16.mxu0 0
      %522 = vmatpush1.bf16.xpose.msra.mxu0 0
      %523 = vmatprep.subr.bf16.mxu0 0
      %524 = vmatpush1.bf16.xpose.msra.mxu0 0
      %525 = vmatprep.subr.bf16.mxu0 0
      %526 = vmatpush1.bf16.xpose.msra.mxu0 0
      %527 = vmatprep.subr.bf16.mxu0 0
      %528 = vmatpush1.bf16.xpose.msra.mxu0 0
      %529 = vmatprep.subr.bf16.mxu0 0
      %530 = vmatpush1.bf16.xpose.msra.mxu0 0
      %531 = vmatprep.subr.bf16.mxu0 0
      %532 = vmatpush1.bf16.xpose.msra.mxu0 0
      %533 = vmatprep.subr.bf16.mxu0 0
      %534 = vmatpush1.bf16.xpose.msra.mxu0 0
      %535 = vmatprep.subr.bf16.mxu0 0
      %536 = vmatpush1.bf16.xpose.msra.mxu0 0
      %537 = vmatprep.subr.bf16.mxu0 0
      %538 = vmatpush1.bf16.xpose.msra.mxu0 0
      %539 = vmatprep.subr.bf16.mxu0 0
      %540 = vmatpush1.bf16.xpose.msra.mxu0 0
      %541 = vmatprep.subr.bf16.mxu0 0
      %542 = vmatpush1.bf16.xpose.msra.mxu0 0
      %543 = vmatprep.subr.bf16.mxu0 0
      %544 = vmatpush1.bf16.xpose.msra.mxu0 0
      %545 = vmatprep.subr.bf16.mxu0 0
      %546 = vmatpush1.bf16.xpose.msra.mxu0 0
      %547 = vmatprep.mubr.bf16.mxu0 0
      %548 = vmatmul.mubr.bf16.gmra.mrb[0].mxu0 %v510
      %v549 = vpop.f32.mrb[0].mxu0
      %v550 = vadd.f32 0.0, %v549
      %v551 = vpop.f32.mrb[0].mxu0
      %v552 = vpop.f32.mrb[0].mxu0
      %v553 = vpop.f32.mrb[0].mxu0
      %554 = vdwg.mxu0
      %v555 = vmul.f32 %v550, 0.35355338
      %v556 = vsel %vm385, %v555, -1e+30
      %v557 = vsel %vm394, %v556, -inf
      %558 = vmax.xlane.f32.xlu0 %v557
      %v559 = vpop.xlane.xlu0 %558
      %v560 = vsub.f32 %v556, %v559
      %v561 = vmul.f32 %v560, 1.442695
      %v562 = vpow.pop %v561
      %v563 = vsel %vm394, %v562, 0.0
      %564 = vadd.xlane.f32.xlu0 %v563
      %v565 = vpop.xlane.xlu0 %564
      %v566 = vrcp.pop %v565
      %v567 = vmul.f32 %v562, %v566
      %v568 = vpack.c.bf16 %v567, %v567
      %569 = vrot.lane.b32.xlu0 %v390, 56
      %v570 = vpop.permute.xlu0 %569
      %v572 = vsel %vm394, %v568, 0
      %v575 = vsel %vm460, %v570, 0
      %577 = vmatprep.subr.bf16.mxu0 0
      %578 = vmatpush1.bf16.msra.mxu0 %v575
      %579 = vmatprep.subr.bf16.mxu0 0
      %580 = vmatpush1.bf16.msra.mxu0 0
      %581 = vmatprep.subr.bf16.mxu0 0
      %582 = vmatpush1.bf16.msra.mxu0 0
      %583 = vmatprep.subr.bf16.mxu0 0
      %584 = vmatpush1.bf16.msra.mxu0 0
      %585 = vmatprep.subr.bf16.mxu0 0
      %586 = vmatpush1.bf16.msra.mxu0 0
      %587 = vmatprep.subr.bf16.mxu0 0
      %588 = vmatpush1.bf16.msra.mxu0 0
      %589 = vmatprep.subr.bf16.mxu0 0
      %590 = vmatpush1.bf16.msra.mxu0 0
      %591 = vmatprep.subr.bf16.mxu0 0
      %592 = vmatpush1.bf16.msra.mxu0 0
      %593 = vmatprep.subr.bf16.mxu0 0
      %594 = vmatpush1.bf16.msra.mxu0 0
      %595 = vmatprep.subr.bf16.mxu0 0
      %596 = vmatpush1.bf16.msra.mxu0 0
      %597 = vmatprep.subr.bf16.mxu0 0
      %598 = vmatpush1.bf16.msra.mxu0 0
      %599 = vmatprep.subr.bf16.mxu0 0
      %600 = vmatpush1.bf16.msra.mxu0 0
      %601 = vmatprep.subr.bf16.mxu0 0
      %602 = vmatpush1.bf16.msra.mxu0 0
      %603 = vmatprep.subr.bf16.mxu0 0
      %604 = vmatpush1.bf16.msra.mxu0 0
      %605 = vmatprep.subr.bf16.mxu0 0
      %606 = vmatpush1.bf16.msra.mxu0 0
      %607 = vmatprep.subr.bf16.mxu0 0
      %608 = vmatpush1.bf16.msra.mxu0 0
      %609 = vmatprep.mubr.bf16.mxu0 0
      %610 = vmatmul.mubr.bf16.gmra.mrb[0].mxu0 %v572
      %v611 = vpop.f32.mrb[0].mxu0
      %v612 = vadd.f32 0.0, %v611
      %v613 = vpop.f32.mrb[0].mxu0
      %v614 = vpop.f32.mrb[0].mxu0
      %v615 = vpop.f32.mrb[0].mxu0
      %616 = vdwg.mxu0
      %v617 = vpack.c.bf16 %v612, %v612
      %v619 = vsel %vm394, %v617, 0
      %v622 = vsel %vm460, %v387, 0
      %624 = vmatprep.subr.bf16.mxu0 0
      %625 = vmatpush1.bf16.msra.mxu0 %v622
      %626 = vmatprep.subr.bf16.mxu0 0
      %627 = vmatpush1.bf16.msra.mxu0 0
      %628 = vmatprep.subr.bf16.mxu0 0
      %629 = vmatpush1.bf16.msra.mxu0 0
      %630 = vmatprep.subr.bf16.mxu0 0
      %631 = vmatpush1.bf16.msra.mxu0 0
      %632 = vmatprep.subr.bf16.mxu0 0
      %633 = vmatpush1.bf16.msra.mxu0 0
      %634 = vmatprep.subr.bf16.mxu0 0
      %635 = vmatpush1.bf16.msra.mxu0 0
      %636 = vmatprep.subr.bf16.mxu0 0
      %637 = vmatpush1.bf16.msra.mxu0 0
      %638 = vmatprep.subr.bf16.mxu0 0
      %639 = vmatpush1.bf16.msra.mxu0 0
      %640 = vmatprep.subr.bf16.mxu0 0
      %641 = vmatpush1.bf16.msra.mxu0 0
      %642 = vmatprep.subr.bf16.mxu0 0
      %643 = vmatpush1.bf16.msra.mxu0 0
      %644 = vmatprep.subr.bf16.mxu0 0
      %645 = vmatpush1.bf16.msra.mxu0 0
      %646 = vmatprep.subr.bf16.mxu0 0
      %647 = vmatpush1.bf16.msra.mxu0 0
      %648 = vmatprep.subr.bf16.mxu0 0
      %649 = vmatpush1.bf16.msra.mxu0 0
      %650 = vmatprep.subr.bf16.mxu0 0
      %651 = vmatpush1.bf16.msra.mxu0 0
      %652 = vmatprep.subr.bf16.mxu0 0
      %653 = vmatpush1.bf16.msra.mxu0 0
      %654 = vmatprep.subr.bf16.mxu0 0
      %655 = vmatpush1.bf16.msra.mxu0 0
      %656 = vmatprep.mubr.bf16.mxu0 0
      %657 = vmatmul.mubr.bf16.gmra.mrb[0].mxu0 %v619
      %v658 = vpop.f32.mrb[0].mxu0
      %v659 = vadd.f32 0.0, %v658
      %v660 = vpop.f32.mrb[0].mxu0
      %v661 = vpop.f32.mrb[0].mxu0
      %v662 = vpop.f32.mrb[0].mxu0
      %663 = vdwg.mxu0
      %v665 = vsel %vm394, %v504, 0
      %v668 = vsel %vm460, %v386, 0
      %670 = vmatprep.subr.bf16.mxu0 0
      %671 = vmatpush1.bf16.msra.mxu0 %v668
      %672 = vmatprep.subr.bf16.mxu0 0
      %673 = vmatpush1.bf16.msra.mxu0 0
      %674 = vmatprep.subr.bf16.mxu0 0
      %675 = vmatpush1.bf16.msra.mxu0 0
      %676 = vmatprep.subr.bf16.mxu0 0
      %677 = vmatpush1.bf16.msra.mxu0 0
      %678 = vmatprep.subr.bf16.mxu0 0
      %679 = vmatpush1.bf16.msra.mxu0 0
      %680 = vmatprep.subr.bf16.mxu0 0
      %681 = vmatpush1.bf16.msra.mxu0 0
      %682 = vmatprep.subr.bf16.mxu0 0
      %683 = vmatpush1.bf16.msra.mxu0 0
      %684 = vmatprep.subr.bf16.mxu0 0
      %685 = vmatpush1.bf16.msra.mxu0 0
      %686 = vmatprep.subr.bf16.mxu0 0
      %687 = vmatpush1.bf16.msra.mxu0 0
      %688 = vmatprep.subr.bf16.mxu0 0
      %689 = vmatpush1.bf16.msra.mxu0 0
      %690 = vmatprep.subr.bf16.mxu0 0
      %691 = vmatpush1.bf16.msra.mxu0 0
      %692 = vmatprep.subr.bf16.mxu0 0
      %693 = vmatpush1.bf16.msra.mxu0 0
      %694 = vmatprep.subr.bf16.mxu0 0
      %695 = vmatpush1.bf16.msra.mxu0 0
      %696 = vmatprep.subr.bf16.mxu0 0
      %697 = vmatpush1.bf16.msra.mxu0 0
      %698 = vmatprep.subr.bf16.mxu0 0
      %699 = vmatpush1.bf16.msra.mxu0 0
      %700 = vmatprep.subr.bf16.mxu0 0
      %701 = vmatpush1.bf16.msra.mxu0 0
      %702 = vmatprep.mubr.bf16.mxu0 0
      %703 = vmatmul.mubr.bf16.gmra.mrb[0].mxu0 %v665
      %v704 = vpop.f32.mrb[0].mxu0
      %v705 = vadd.f32 %v659, %v704
      %v706 = vpop.f32.mrb[0].mxu0
      %v707 = vpop.f32.mrb[0].mxu0
      %v708 = vpop.f32.mrb[0].mxu0
      %709 = vdwg.mxu0
      %710 = vrot.lane.b32.xlu0 %v390, 112
      %v711 = vpop.permute.xlu0 %710
      %712 = vrot.lane.b32.xlu0 %v390, 80
      %v713 = vpop.permute.xlu0 %712
      %v715 = vsel %vm394, %v711, 0
      %v718 = vsel %vm394, %v713, 0
      %720 = vmatprep.subr.bf16.mxu0 0
      %721 = vmatpush1.bf16.xpose.msra.mxu0 %v718
      %722 = vmatprep.subr.bf16.mxu0 0
      %723 = vmatpush1.bf16.xpose.msra.mxu0 0
      %724 = vmatprep.subr.bf16.mxu0 0
      %725 = vmatpush1.bf16.xpose.msra.mxu0 0
      %726 = vmatprep.subr.bf16.mxu0 0
      %727 = vmatpush1.bf16.xpose.msra.mxu0 0
      %728 = vmatprep.subr.bf16.mxu0 0
      %729 = vmatpush1.bf16.xpose.msra.mxu0 0
      %730 = vmatprep.subr.bf16.mxu0 0
      %731 = vmatpush1.bf16.xpose.msra.mxu0 0
      %732 = vmatprep.subr.bf16.mxu0 0
      %733 = vmatpush1.bf16.xpose.msra.mxu0 0
      %734 = vmatprep.subr.bf16.mxu0 0
      %735 = vmatpush1.bf16.xpose.msra.mxu0 0
      %736 = vmatprep.subr.bf16.mxu0 0
      %737 = vmatpush1.bf16.xpose.msra.mxu0 0
      %738 = vmatprep.subr.bf16.mxu0 0
      %739 = vmatpush1.bf16.xpose.msra.mxu0 0
      %740 = vmatprep.subr.bf16.mxu0 0
      %741 = vmatpush1.bf16.xpose.msra.mxu0 0
      %742 = vmatprep.subr.bf16.mxu0 0
      %743 = vmatpush1.bf16.xpose.msra.mxu0 0
      %744 = vmatprep.subr.bf16.mxu0 0
      %745 = vmatpush1.bf16.xpose.msra.mxu0 0
      %746 = vmatprep.subr.bf16.mxu0 0
      %747 = vmatpush1.bf16.xpose.msra.mxu0 0
      %748 = vmatprep.subr.bf16.mxu0 0
      %749 = vmatpush1.bf16.xpose.msra.mxu0 0
      %750 = vmatprep.subr.bf16.mxu0 0
      %751 = vmatpush1.bf16.xpose.msra.mxu0 0
      %752 = vmatprep.mubr.bf16.mxu0 0
      %753 = vmatmul.mubr.bf16.gmra.mrb[0].mxu0 %v715
      %v754 = vpop.f32.mrb[0].mxu0
      %v755 = vadd.f32 0.0, %v754
      %v756 = vpop.f32.mrb[0].mxu0
      %v757 = vpop.f32.mrb[0].mxu0
      %v758 = vpop.f32.mrb[0].mxu0
      %759 = vdwg.mxu0
      %v760 = vmul.f32 %v755, 0.35355338
      %v761 = vsel %vm385, %v760, -1e+30
      %v762 = vsel %vm394, %v761, -inf
      %763 = vmax.xlane.f32.xlu0 %v762
      %v764 = vpop.xlane.xlu0 %763
      %v765 = vsub.f32 %v761, %v764
      %v766 = vmul.f32 %v765, 1.442695
      %v767 = vpow.pop %v766
      %v768 = vsel %vm394, %v767, 0.0
      %769 = vadd.xlane.f32.xlu0 %v768
      %v770 = vpop.xlane.xlu0 %769
      %v771 = vrcp.pop %v770
      %v772 = vmul.f32 %v767, %v771
      %v773 = vpack.c.bf16 %v772, %v772
      %774 = vrot.lane.b32.xlu0 %v390, 48
      %v775 = vpop.permute.xlu0 %774
      %v777 = vsel %vm394, %v773, 0
      %v780 = vsel %vm460, %v775, 0
      %782 = vmatprep.subr.bf16.mxu0 0
      %783 = vmatpush1.bf16.msra.mxu0 %v780
      %784 = vmatprep.subr.bf16.mxu0 0
      %785 = vmatpush1.bf16.msra.mxu0 0
      %786 = vmatprep.subr.bf16.mxu0 0
      %787 = vmatpush1.bf16.msra.mxu0 0
      %788 = vmatprep.subr.bf16.mxu0 0
      %789 = vmatpush1.bf16.msra.mxu0 0
      %790 = vmatprep.subr.bf16.mxu0 0
      %791 = vmatpush1.bf16.msra.mxu0 0
      %792 = vmatprep.subr.bf16.mxu0 0
      %793 = vmatpush1.bf16.msra.mxu0 0
      %794 = vmatprep.subr.bf16.mxu0 0
      %795 = vmatpush1.bf16.msra.mxu0 0
      %796 = vmatprep.subr.bf16.mxu0 0
      %797 = vmatpush1.bf16.msra.mxu0 0
      %798 = vmatprep.subr.bf16.mxu0 0
      %799 = vmatpush1.bf16.msra.mxu0 0
      %800 = vmatprep.subr.bf16.mxu0 0
      %801 = vmatpush1.bf16.msra.mxu0 0
      %802 = vmatprep.subr.bf16.mxu0 0
      %803 = vmatpush1.bf16.msra.mxu0 0
      %804 = vmatprep.subr.bf16.mxu0 0
      %805 = vmatpush1.bf16.msra.mxu0 0
      %806 = vmatprep.subr.bf16.mxu0 0
      %807 = vmatpush1.bf16.msra.mxu0 0
      %808 = vmatprep.subr.bf16.mxu0 0
      %809 = vmatpush1.bf16.msra.mxu0 0
      %810 = vmatprep.subr.bf16.mxu0 0
      %811 = vmatpush1.bf16.msra.mxu0 0
      %812 = vmatprep.subr.bf16.mxu0 0
      %813 = vmatpush1.bf16.msra.mxu0 0
      %814 = vmatprep.mubr.bf16.mxu0 0
      %815 = vmatmul.mubr.bf16.gmra.mrb[0].mxu0 %v777
      %v816 = vpop.f32.mrb[0].mxu0
      %v817 = vadd.f32 0.0, %v816
      %v818 = vpop.f32.mrb[0].mxu0
      %v819 = vpop.f32.mrb[0].mxu0
      %v820 = vpop.f32.mrb[0].mxu0
      %821 = vdwg.mxu0
      %v822 = vpack.c.bf16 %v817, %v817
      %v824 = vsel %vm394, %v822, 0
      %v827 = vsel %vm460, %v388, 0
      %829 = vmatprep.subr.bf16.mxu0 0
      %830 = vmatpush1.bf16.msra.mxu0 %v827
      %831 = vmatprep.subr.bf16.mxu0 0
      %832 = vmatpush1.bf16.msra.mxu0 0
      %833 = vmatprep.subr.bf16.mxu0 0
      %834 = vmatpush1.bf16.msra.mxu0 0
      %835 = vmatprep.subr.bf16.mxu0 0
      %836 = vmatpush1.bf16.msra.mxu0 0
      %837 = vmatprep.subr.bf16.mxu0 0
      %838 = vmatpush1.bf16.msra.mxu0 0
      %839 = vmatprep.subr.bf16.mxu0 0
      %840 = vmatpush1.bf16.msra.mxu0 0
      %841 = vmatprep.subr.bf16.mxu0 0
      %842 = vmatpush1.bf16.msra.mxu0 0
      %843 = vmatprep.subr.bf16.mxu0 0
      %844 = vmatpush1.bf16.msra.mxu0 0
      %845 = vmatprep.subr.bf16.mxu0 0
      %846 = vmatpush1.bf16.msra.mxu0 0
      %847 = vmatprep.subr.bf16.mxu0 0
      %848 = vmatpush1.bf16.msra.mxu0 0
      %849 = vmatprep.subr.bf16.mxu0 0
      %850 = vmatpush1.bf16.msra.mxu0 0
      %851 = vmatprep.subr.bf16.mxu0 0
      %852 = vmatpush1.bf16.msra.mxu0 0
      %853 = vmatprep.subr.bf16.mxu0 0
      %854 = vmatpush1.bf16.msra.mxu0 0
      %855 = vmatprep.subr.bf16.mxu0 0
      %856 = vmatpush1.bf16.msra.mxu0 0
      %857 = vmatprep.subr.bf16.mxu0 0
      %858 = vmatpush1.bf16.msra.mxu0 0
      %859 = vmatprep.subr.bf16.mxu0 0
      %860 = vmatpush1.bf16.msra.mxu0 0
      %861 = vmatprep.mubr.bf16.mxu0 0
      %862 = vmatmul.mubr.bf16.gmra.mrb[0].mxu0 %v824
      %v863 = vpop.f32.mrb[0].mxu0
      %v864 = vadd.f32 0.0, %v863
      %v865 = vpop.f32.mrb[0].mxu0
      %v866 = vpop.f32.mrb[0].mxu0
      %v867 = vpop.f32.mrb[0].mxu0
      %868 = vdwg.mxu0
      %v869 = vadd.f32 %v705, %v864
      %870 = vrot.lane.b32.xlu0 %v390, 104
      %v871 = vpop.permute.xlu0 %870
      %872 = vrot.lane.b32.xlu0 %v390, 72
      %v873 = vpop.permute.xlu0 %872
      %v875 = vsel %vm394, %v871, 0
      %v878 = vsel %vm394, %v873, 0
      %880 = vmatprep.subr.bf16.mxu0 0
      %881 = vmatpush1.bf16.xpose.msra.mxu0 %v878
      %882 = vmatprep.subr.bf16.mxu0 0
      %883 = vmatpush1.bf16.xpose.msra.mxu0 0
      %884 = vmatprep.subr.bf16.mxu0 0
      %885 = vmatpush1.bf16.xpose.msra.mxu0 0
      %886 = vmatprep.subr.bf16.mxu0 0
      %887 = vmatpush1.bf16.xpose.msra.mxu0 0
      %888 = vmatprep.subr.bf16.mxu0 0
      %889 = vmatpush1.bf16.xpose.msra.mxu0 0
      %890 = vmatprep.subr.bf16.mxu0 0
      %891 = vmatpush1.bf16.xpose.msra.mxu0 0
      %892 = vmatprep.subr.bf16.mxu0 0
      %893 = vmatpush1.bf16.xpose.msra.mxu0 0
      %894 = vmatprep.subr.bf16.mxu0 0
      %895 = vmatpush1.bf16.xpose.msra.mxu0 0
      %896 = vmatprep.subr.bf16.mxu0 0
      %897 = vmatpush1.bf16.xpose.msra.mxu0 0
      %898 = vmatprep.subr.bf16.mxu0 0
      %899 = vmatpush1.bf16.xpose.msra.mxu0 0
      %900 = vmatprep.subr.bf16.mxu0 0
      %901 = vmatpush1.bf16.xpose.msra.mxu0 0
      %902 = vmatprep.subr.bf16.mxu0 0
      %903 = vmatpush1.bf16.xpose.msra.mxu0 0
      %904 = vmatprep.subr.bf16.mxu0 0
      %905 = vmatpush1.bf16.xpose.msra.mxu0 0
      %906 = vmatprep.subr.bf16.mxu0 0
      %907 = vmatpush1.bf16.xpose.msra.mxu0 0
      %908 = vmatprep.subr.bf16.mxu0 0
      %909 = vmatpush1.bf16.xpose.msra.mxu0 0
      %910 = vmatprep.subr.bf16.mxu0 0
      %911 = vmatpush1.bf16.xpose.msra.mxu0 0
      %912 = vmatprep.mubr.bf16.mxu0 0
      %913 = vmatmul.mubr.bf16.gmra.mrb[0].mxu0 %v875
      %v914 = vpop.f32.mrb[0].mxu0
      %v915 = vadd.f32 0.0, %v914
      %v916 = vpop.f32.mrb[0].mxu0
      %v917 = vpop.f32.mrb[0].mxu0
      %v918 = vpop.f32.mrb[0].mxu0
      %919 = vdwg.mxu0
      %v920 = vmul.f32 %v915, 0.35355338
      %v921 = vsel %vm385, %v920, -1e+30
      %v922 = vsel %vm394, %v921, -inf
      %923 = vmax.xlane.f32.xlu0 %v922
      %v924 = vpop.xlane.xlu0 %923
      %v925 = vsub.f32 %v921, %v924
      %v926 = vmul.f32 %v925, 1.442695
      %v927 = vpow.pop %v926
      %v928 = vsel %vm394, %v927, 0.0
      %929 = vadd.xlane.f32.xlu0 %v928
      %v930 = vpop.xlane.xlu0 %929
      %v931 = vrcp.pop %v930
      %v932 = vmul.f32 %v927, %v931
      %v933 = vpack.c.bf16 %v932, %v932
      %934 = vrot.lane.b32.xlu0 %v390, 40
      %v935 = vpop.permute.xlu0 %934
      %v937 = vsel %vm394, %v933, 0
      %v940 = vsel %vm460, %v935, 0
      %942 = vmatprep.subr.bf16.mxu0 0
      %943 = vmatpush1.bf16.msra.mxu0 %v940
      %944 = vmatprep.subr.bf16.mxu0 0
      %945 = vmatpush1.bf16.msra.mxu0 0
      %946 = vmatprep.subr.bf16.mxu0 0
      %947 = vmatpush1.bf16.msra.mxu0 0
      %948 = vmatprep.subr.bf16.mxu0 0
      %949 = vmatpush1.bf16.msra.mxu0 0
      %950 = vmatprep.subr.bf16.mxu0 0
      %951 = vmatpush1.bf16.msra.mxu0 0
      %952 = vmatprep.subr.bf16.mxu0 0
      %953 = vmatpush1.bf16.msra.mxu0 0
      %954 = vmatprep.subr.bf16.mxu0 0
      %955 = vmatpush1.bf16.msra.mxu0 0
      %956 = vmatprep.subr.bf16.mxu0 0
      %957 = vmatpush1.bf16.msra.mxu0 0
      %958 = vmatprep.subr.bf16.mxu0 0
      %959 = vmatpush1.bf16.msra.mxu0 0
      %960 = vmatprep.subr.bf16.mxu0 0
      %961 = vmatpush1.bf16.msra.mxu0 0
      %962 = vmatprep.subr.bf16.mxu0 0
      %963 = vmatpush1.bf16.msra.mxu0 0
      %964 = vmatprep.subr.bf16.mxu0 0
      %965 = vmatpush1.bf16.msra.mxu0 0
      %966 = vmatprep.subr.bf16.mxu0 0
      %967 = vmatpush1.bf16.msra.mxu0 0
      %968 = vmatprep.subr.bf16.mxu0 0
      %969 = vmatpush1.bf16.msra.mxu0 0
      %970 = vmatprep.subr.bf16.mxu0 0
      %971 = vmatpush1.bf16.msra.mxu0 0
      %972 = vmatprep.subr.bf16.mxu0 0
      %973 = vmatpush1.bf16.msra.mxu0 0
      %974 = vmatprep.mubr.bf16.mxu0 0
      %975 = vmatmul.mubr.bf16.gmra.mrb[0].mxu0 %v937
      %v976 = vpop.f32.mrb[0].mxu0
      %v977 = vadd.f32 0.0, %v976
      %v978 = vpop.f32.mrb[0].mxu0
      %v979 = vpop.f32.mrb[0].mxu0
      %v980 = vpop.f32.mrb[0].mxu0
      %981 = vdwg.mxu0
      %v982 = vpack.c.bf16 %v977, %v977
      %v984 = vsel %vm394, %v982, 0
      %v987 = vsel %vm460, %v389, 0
      %989 = vmatprep.subr.bf16.mxu0 0
      %990 = vmatpush1.bf16.msra.mxu0 %v987
      %991 = vmatprep.subr.bf16.mxu0 0
      %992 = vmatpush1.bf16.msra.mxu0 0
      %993 = vmatprep.subr.bf16.mxu0 0
      %994 = vmatpush1.bf16.msra.mxu0 0
      %995 = vmatprep.subr.bf16.mxu0 0
      %996 = vmatpush1.bf16.msra.mxu0 0
      %997 = vmatprep.subr.bf16.mxu0 0
      %998 = vmatpush1.bf16.msra.mxu0 0
      %999 = vmatprep.subr.bf16.mxu0 0
      %1000 = vmatpush1.bf16.msra.mxu0 0
      %1001 = vmatprep.subr.bf16.mxu0 0
      %1002 = vmatpush1.bf16.msra.mxu0 0
      %1003 = vmatprep.subr.bf16.mxu0 0
      %1004 = vmatpush1.bf16.msra.mxu0 0
      %1005 = vmatprep.subr.bf16.mxu0 0
      %1006 = vmatpush1.bf16.msra.mxu0 0
      %1007 = vmatprep.subr.bf16.mxu0 0
      %1008 = vmatpush1.bf16.msra.mxu0 0
      %1009 = vmatprep.subr.bf16.mxu0 0
      %1010 = vmatpush1.bf16.msra.mxu0 0
      %1011 = vmatprep.subr.bf16.mxu0 0
      %1012 = vmatpush1.bf16.msra.mxu0 0
      %1013 = vmatprep.subr.bf16.mxu0 0
      %1014 = vmatpush1.bf16.msra.mxu0 0
      %1015 = vmatprep.subr.bf16.mxu0 0
      %1016 = vmatpush1.bf16.msra.mxu0 0
      %1017 = vmatprep.subr.bf16.mxu0 0
      %1018 = vmatpush1.bf16.msra.mxu0 0
      %1019 = vmatprep.subr.bf16.mxu0 0
      %1020 = vmatpush1.bf16.msra.mxu0 0
      %1021 = vmatprep.mubr.bf16.mxu0 0
      %1022 = vmatmul.mubr.bf16.gmra.mrb[0].mxu0 %v984
      %v1023 = vpop.f32.mrb[0].mxu0
      %v1024 = vadd.f32 0.0, %v1023
      %v1025 = vpop.f32.mrb[0].mxu0
      %v1026 = vpop.f32.mrb[0].mxu0
      %v1027 = vpop.f32.mrb[0].mxu0
      %1028 = vdwg.mxu0
      %v1029 = vadd.f32 %v869, %v1024
      %v1030 = vadd.f32 %v302, %v1029
      %v1031 = vld [vmem:[%s4] sm:$0x1]
      %v1032 = vmul.f32 %v1030, %v1030
      %v1033 = vsel %vm305, %v1032, 0.0
      %1034 = vadd.xlane.f32.xlu0 %v1033
      %v1035 = vpop.xlane.xlu0 %1034
      %v1036 = vmul.f32 %v1035, %v309
      %v1037 = vadd.f32 %v1036, 1e-06
      %v1038 = vrsqrt.pop %v1037
      %v1039 = vmul.f32 %v1030, %v1038
      %v1041 = vlaneseq
      %v1042 = vshrl.u32 %v1041, 7
      %v1043 = vsub.s32 0, %v1042
      %v1044 = vrot.slane %v1031, %v1043
      %v1046 = vmul.f32 %v1039, %v1044
      %v1047 = vpack.c.bf16 %v1046, %v1046
      %v1048 = vld [vmem:[%s5] sm:$0xf]
      %v1049 = vld [vmem:[%s5 + $0x4] sm:$0xf]
      %v1050 = vld [vmem:[%s5 + $0x8] sm:$0xf]
      %v1051 = vld [vmem:[%s5 + $0xc] sm:$0xf]
      %v1056 = vunpack.c.l.b16 %v1048
      %v1057 = vunpack.c.l.b16 %v1049
      %v1058 = vunpack.c.l.b16 %v1050
      %v1059 = vunpack.c.l.b16 %v1051
      %v1060 = vpack.c.b16 %v1057, %v1056
      %v1061 = vpack.c.b16 %v1059, %v1058
      %v1065 = vsel %vm305, %v1047, 0
      %1067 = vmatprep.subr.bf16.mxu0 0
      %1068 = vmatpush1.bf16.msra.mxu0 %v1060
      %1069 = vmatprep.subr.bf16.mxu0 0
      %1070 = vmatpush1.bf16.msra.mxu0 %v1061
      %1071 = vmatprep.subr.bf16.mxu0 0
      %1072 = vmatpush1.bf16.msra.mxu0 0
      %1073 = vmatprep.subr.bf16.mxu0 0
      %1074 = vmatpush1.bf16.msra.mxu0 0
      %1075 = vmatprep.subr.bf16.mxu0 0
      %1076 = vmatpush1.bf16.msra.mxu0 0
      %1077 = vmatprep.subr.bf16.mxu0 0
      %1078 = vmatpush1.bf16.msra.mxu0 0
      %1079 = vmatprep.subr.bf16.mxu0 0
      %1080 = vmatpush1.bf16.msra.mxu0 0
      %1081 = vmatprep.subr.bf16.mxu0 0
      %1082 = vmatpush1.bf16.msra.mxu0 0
      %1083 = vmatprep.subr.bf16.mxu0 0
      %1084 = vmatpush1.bf16.msra.mxu0 0
      %1085 = vmatprep.subr.bf16.mxu0 0
      %1086 = vmatpush1.bf16.msra.mxu0 0
      %1087 = vmatprep.subr.bf16.mxu0 0
      %1088 = vmatpush1.bf16.msra.mxu0 0
      %1089 = vmatprep.subr.bf16.mxu0 0
      %1090 = vmatpush1.bf16.msra.mxu0 0
      %1091 = vmatprep.subr.bf16.mxu0 0
      %1092 = vmatpush1.bf16.msra.mxu0 0
      %1093 = vmatprep.subr.bf16.mxu0 0
      %1094 = vmatpush1.bf16.msra.mxu0 0
      %1095 = vmatprep.subr.bf16.mxu0 0
      %1096 = vmatpush1.bf16.msra.mxu0 0
      %1097 = vmatprep.subr.bf16.mxu0 0
      %1098 = vmatpush1.bf16.msra.mxu0 0
      %1099 = vmatprep.mubr.bf16.mxu0 0
      %1100 = vmatmul.mubr.bf16.gmra.mrb[0].mxu0 %v1065
      %v1101 = vpop.f32.mrb[0].mxu0
      %v1102 = vadd.f32 0.0, %v1101
      %v1103 = vpop.f32.mrb[0].mxu0
      %v1104 = vpop.f32.mrb[0].mxu0
      %v1105 = vpop.f32.mrb[0].mxu0
      %1106 = vdwg.mxu0
      %v1107 = vld [vmem:[%s6] sm:$0xf]
      %v1108 = vld [vmem:[%s6 + $0x4] sm:$0xf]
      %v1109 = vld [vmem:[%s6 + $0x8] sm:$0xf]
      %v1110 = vld [vmem:[%s6 + $0xc] sm:$0xf]
      %v1115 = vunpack.c.l.b16 %v1107
      %v1116 = vunpack.c.l.b16 %v1108
      %v1117 = vunpack.c.l.b16 %v1109
      %v1118 = vunpack.c.l.b16 %v1110
      %v1119 = vpack.c.b16 %v1116, %v1115
      %v1120 = vpack.c.b16 %v1118, %v1117
      %1123 = vmatprep.subr.bf16.mxu0 0
      %1124 = vmatpush1.bf16.msra.mxu0 %v1119
      %1125 = vmatprep.subr.bf16.mxu0 0
      %1126 = vmatpush1.bf16.msra.mxu0 %v1120
      %1127 = vmatprep.subr.bf16.mxu0 0
      %1128 = vmatpush1.bf16.msra.mxu0 0
      %1129 = vmatprep.subr.bf16.mxu0 0
      %1130 = vmatpush1.bf16.msra.mxu0 0
      %1131 = vmatprep.subr.bf16.mxu0 0
      %1132 = vmatpush1.bf16.msra.mxu0 0
      %1133 = vmatprep.subr.bf16.mxu0 0
      %1134 = vmatpush1.bf16.msra.mxu0 0
      %1135 = vmatprep.subr.bf16.mxu0 0
      %1136 = vmatpush1.bf16.msra.mxu0 0
      %1137 = vmatprep.subr.bf16.mxu0 0
      %1138 = vmatpush1.bf16.msra.mxu0 0
      %1139 = vmatprep.subr.bf16.mxu0 0
      %1140 = vmatpush1.bf16.msra.mxu0 0
      %1141 = vmatprep.subr.bf16.mxu0 0
      %1142 = vmatpush1.bf16.msra.mxu0 0
      %1143 = vmatprep.subr.bf16.mxu0 0
      %1144 = vmatpush1.bf16.msra.mxu0 0
      %1145 = vmatprep.subr.bf16.mxu0 0
      %1146 = vmatpush1.bf16.msra.mxu0 0
      %1147 = vmatprep.subr.bf16.mxu0 0
      %1148 = vmatpush1.bf16.msra.mxu0 0
      %1149 = vmatprep.subr.bf16.mxu0 0
      %1150 = vmatpush1.bf16.msra.mxu0 0
      %1151 = vmatprep.subr.bf16.mxu0 0
      %1152 = vmatpush1.bf16.msra.mxu0 0
      %1153 = vmatprep.subr.bf16.mxu0 0
      %1154 = vmatpush1.bf16.msra.mxu0 0
      %1155 = vmatprep.mubr.bf16.mxu0 0
      %1156 = vmatmul.mubr.bf16.gmra.mrb[0].mxu0 %v1065
      %v1157 = vpop.f32.mrb[0].mxu0
      %v1158 = vadd.f32 0.0, %v1157
      %v1159 = vpop.f32.mrb[0].mxu0
      %v1160 = vpop.f32.mrb[0].mxu0
      %v1161 = vpop.f32.mrb[0].mxu0
      %1162 = vdwg.mxu0
      %v1163 = vxor.u32 %v1102, 2147483648
      %v1164 = vmul.f32 %v1163, 1.442695
      %v1165 = vpow.pop %v1164
      %v1166 = vadd.f32 %v1165, 1.0
      %v1167 = vrcp.pop %v1166
      %v1168 = vmul.f32 1.0, %v1167
      %v1169 = vmul.f32 %v1102, %v1168
      %v1170 = vmul.f32 %v1169, %v1158
      %v1171 = vpack.c.bf16 %v1170, %v1170
      %v1172 = vld [vmem:[%s7] sm:$0xf]
      %v1173 = vld [vmem:[%s7 + $0x4] sm:$0xf]
      %v1174 = vld [vmem:[%s7 + $0x8] sm:$0xf]
      %v1175 = vld [vmem:[%s7 + $0xc] sm:$0xf]
      %v1176 = vld [vmem:[%s7 + $0x10] sm:$0xf]
      %v1177 = vld [vmem:[%s7 + $0x14] sm:$0xf]
      %v1178 = vld [vmem:[%s7 + $0x18] sm:$0xf]
      %v1179 = vld [vmem:[%s7 + $0x1c] sm:$0xf]
      %v1188 = vunpack.c.l.b16 %v1172
      %v1189 = vunpack.c.l.b16 %v1173
      %v1190 = vunpack.c.l.b16 %v1174
      %v1191 = vunpack.c.l.b16 %v1175
      %v1192 = vunpack.c.l.b16 %v1176
      %v1193 = vunpack.c.l.b16 %v1177
      %v1194 = vunpack.c.l.b16 %v1178
      %v1195 = vunpack.c.l.b16 %v1179
      %v1196 = vpack.c.b16 %v1189, %v1188
      %v1197 = vpack.c.b16 %v1191, %v1190
      %v1198 = vpack.c.b16 %v1193, %v1192
      %v1199 = vpack.c.b16 %v1195, %v1194
      %vm1204 = vcmask 523264
      %v1206 = vsel %vm1204, %v1171, 0
      %1208 = vmatprep.subr.bf16.mxu0 0
      %1209 = vmatpush1.bf16.msra.mxu0 %v1196
      %1210 = vmatprep.subr.bf16.mxu0 0
      %1211 = vmatpush1.bf16.msra.mxu0 %v1197
      %1212 = vmatprep.subr.bf16.mxu0 0
      %1213 = vmatpush1.bf16.msra.mxu0 %v1198
      %1214 = vmatprep.subr.bf16.mxu0 0
      %1215 = vmatpush1.bf16.msra.mxu0 %v1199
      %1216 = vmatprep.subr.bf16.mxu0 0
      %1217 = vmatpush1.bf16.msra.mxu0 0
      %1218 = vmatprep.subr.bf16.mxu0 0
      %1219 = vmatpush1.bf16.msra.mxu0 0
      %1220 = vmatprep.subr.bf16.mxu0 0
      %1221 = vmatpush1.bf16.msra.mxu0 0
      %1222 = vmatprep.subr.bf16.mxu0 0
      %1223 = vmatpush1.bf16.msra.mxu0 0
      %1224 = vmatprep.subr.bf16.mxu0 0
      %1225 = vmatpush1.bf16.msra.mxu0 0
      %1226 = vmatprep.subr.bf16.mxu0 0
      %1227 = vmatpush1.bf16.msra.mxu0 0
      %1228 = vmatprep.subr.bf16.mxu0 0
      %1229 = vmatpush1.bf16.msra.mxu0 0
      %1230 = vmatprep.subr.bf16.mxu0 0
      %1231 = vmatpush1.bf16.msra.mxu0 0
      %1232 = vmatprep.subr.bf16.mxu0 0
      %1233 = vmatpush1.bf16.msra.mxu0 0
      %1234 = vmatprep.subr.bf16.mxu0 0
      %1235 = vmatpush1.bf16.msra.mxu0 0
      %1236 = vmatprep.subr.bf16.mxu0 0
      %1237 = vmatpush1.bf16.msra.mxu0 0
      %1238 = vmatprep.subr.bf16.mxu0 0
      %1239 = vmatpush1.bf16.msra.mxu0 0
      %1240 = vmatprep.mubr.bf16.mxu0 0
      %1241 = vmatmul.mubr.bf16.gmra.mrb[0].mxu0 %v1206
      %v1242 = vpop.f32.mrb[0].mxu0
      %v1243 = vadd.f32 0.0, %v1242
      %v1244 = vpop.f32.mrb[0].mxu0
      %v1245 = vpop.f32.mrb[0].mxu0
      %v1246 = vpop.f32.mrb[0].mxu0
      %1247 = vdwg.mxu0
      %v1248 = vadd.f32 %v1030, %v1243
      %1249 = vst.msk [vmem:[%s300] sm:$0xff] %vm305, %v1248
      %p1250 = scmp.lt.s32.totalorder %s19, 1
      %s1251 = scalar_select %p1250, %s19, 1
      %s1252 = smul.addr %s1251, 8
      %s1253 = scalar_lea.vmem %s8, %s1252
      // Predicated region
      $region53: #{plantgfm_embd_forward.3} parent=51 // pred_check
        %p1254 = pneg %p210
      $region54: #{plantgfm_embd_forward.3} parent=51 // pred_check_branch
        %1256 = sbr.rel (%p1254) target = $region56
      $region55: #{plantgfm_embd_forward.3} parent=51 // pred_region
        _
      $region56: #{plantgfm_embd_forward.3} parent=51 // pred_fallthru
        _
    $region52: #{plantgfm_embd_forward.3} parent=5 // pred_fallthru
      _
    %p1257 = scmp.le.s32.totalorder 2, %s14
    // Predicated region
    $region57: #{plantgfm_embd_forward.3} parent=5 // pred_check
      %p1258 = pneg %p1257
    $region58: #{plantgfm_embd_forward.3} parent=5 // pred_check_branch
      %1260 = sbr.rel (%p1258) target = $region60
    $region59: #{plantgfm_embd_forward.3} parent=5 // pred_region
      %s1261 = ssub.s32 %s14, 2
      // Predicated region
      $region61: #{plantgfm_embd_forward.3} parent=59 // pred_check
        %p1262 = pneg %p216
      $region62: #{plantgfm_embd_forward.3} parent=59 // pred_check_branch
        %1264 = sbr.rel (%p1262) target = $region64
      $region63: #{plantgfm_embd_forward.3} parent=59 // pred_region
        %p1265 = scmp.lt.s32.totalorder %s20, 1
        %s1266 = scalar_select %p1265, %s20, 1
        %s1267 = smul.addr %s1266, 8
        %s1268 = scalar_lea.vmem %s8, %s1267
      $region64: #{plantgfm_embd_forward.3} parent=59 // pred_fallthru
        _
    $region60: #{plantgfm_embd_forward.3} parent=5 // pred_fallthru
      _
  $region6: #{plantgfm_embd_forward.3} parent=0 // loop_footer
    %s18 = sadd.s32 1, %s14
  $region7: #{plantgfm_embd_forward.3} parent=0 // loop_footer_branch
    %13 = sbr.rel target = $region3
  $region8: #{plantgfm_embd_forward.3} parent=0 // loop_exit
    _

</llo_original>
